<compile_context>
chip_gen: v7x
topology: tpu7x:2x2x1
jax: 0.10.0
libtpu: 0.0.40
codegen_flags: <defaults>
</compile_context>

<pallas_src>
import math

import jax
import jax.numpy as jnp
from jax.experimental import pallas as pl
from jax.experimental.pallas import tpu as pltpu


def _paa_kernel(w_ref, b_ref, prT_ref, plen_ref, rvT_ref, rlen_ref, out_ref):
    BB, Lp, Hp = prT_ref.shape           # (batch block, padded product len, padded hidden)
    Lr = rvT_ref.shape[1]                # padded review len

    prT = prT_ref[...]                   # (BB, Lp, Hp)   product_repr^T
    rvT = rvT_ref[...]                   # (BB, Lr, Hp)   review_repr^T

    # p = relu(product_repr^T @ W + b) as one 2-D MXU matmul (Lp is a multiple
    # of 8, so the reshape is layout-free).
    # NOTE: at production sizes, cast prT/rvT/W to bf16 here on v6e/v7x
    # (keep preferred_element_type=f32); kept f32 at these tiny shapes.
    p = jnp.dot(prT.reshape(BB * Lp, Hp), w_ref[...],
                preferred_element_type=jnp.float32)
    p = jnp.maximum(p + b_ref[...], 0.0).reshape(BB, Lp, Hp)   # (BB, Lp, Hp)

    # Scores held transposed (review on sublanes, product on lanes):
    # qT[b, r, p] = sum_h rvT[b, r, h] * p[b, p, h]    ("Q @ K^T" pattern)
    qT = jax.lax.dot_general(rvT, p, (((2,), (2,)), ((0,), (0,))),
                             preferred_element_type=jnp.float32)  # (BB, Lr, Lp)

    # Product-side unpadding mask from lengths (iota + compare; no mask DMAs).
    pidx = jax.lax.broadcasted_iota(jnp.int32, (BB, 1, Lp), 2)
    pvalid = pidx < plen_ref[...][:, :, None]                     # (BB, 1, Lp)
    qT = jnp.where(pvalid, qT, -1e23)     # same additive-mask value as torch

    # Softmax over the product axis (= minor/lane axis here).
    m = jnp.max(qT, axis=2, keepdims=True)
    e = jnp.exp(qT - m)
    s = jnp.sum(e, axis=2, keepdims=True)
    attnT = e * pl.reciprocal(s, approx=True)                     # (BB, Lr, Lp)

    # out[b, r, h] = sum_p attnT[b, r, p] * prT[b, p, h] + rvT[b, r, h]
    # ("P @ V" pattern) -> already in the final (Lr, H) layout, no transpose.
    r = jax.lax.dot_general(attnT, prT, (((2,), (1,)), ((0,), (0,))),
                            preferred_element_type=jnp.float32) + rvT

    # Review-side unpadding mask.
    ridx = jax.lax.broadcasted_iota(jnp.int32, (BB, Lr, 1), 1)
    rvalid = ridx < rlen_ref[...][:, :, None]                     # (BB, Lr, 1)
    out_ref[...] = jnp.where(rvalid, r, 0.0)


def _round_up(x, m):
    return ((x + m - 1) // m) * m


def product_aware_attention(w, b, product_repr, product_mask, review_repr,
                            review_mask, *, block_b=8):
    """
    w:            (H, H)    float32
    b:            (1, H)    float32
    product_repr: (B, H, Lp) float32
    product_mask: (B, Lp)    bool   (prefix unpadding mask, as in generate_seq_mask)
    review_repr:  (B, H, Lr) float32
    review_mask:  (B, Lr)    bool   (prefix unpadding mask)
    returns:      (B, Lr, H) float32
    """
    B, H, Lp = product_repr.shape
    Lr = review_repr.shape[2]

    # Hardware-friendly padded sizes (lane-dense H, sublane-aligned Lp/Lr/B).
    Hp = _round_up(max(H, 1), 128)
    Lpp = _round_up(Lp, 8)
    Lrp = _round_up(Lr, 8)
    BB = block_b                      # multiple of 8 (length-block sublane constraint)
    Bp = _round_up(B, BB)

    # Sequence lengths (tiny int32 inputs) instead of full float mask tensors.
    plen = jnp.sum(product_mask.astype(jnp.int32), axis=1).reshape(B, 1)
    rlen = jnp.sum(review_mask.astype(jnp.int32), axis=1).reshape(B, 1)
    plen = jnp.pad(plen, ((0, Bp - B), (0, 0)))
    rlen = jnp.pad(rlen, ((0, Bp - B), (0, 0)))

    # Sequence-major, feature-last layout; pad with zeros (masked / sliced off).
    prT = jnp.pad(jnp.transpose(product_repr, (0, 2, 1)),
                  ((0, Bp - B), (0, Lpp - Lp), (0, Hp - H)))
    rvT = jnp.pad(jnp.transpose(review_repr, (0, 2, 1)),
                  ((0, Bp - B), (0, Lrp - Lr), (0, Hp - H)))
    w_p = jnp.pad(w, ((0, Hp - H), (0, Hp - H)))
    b_p = jnp.pad(b, ((0, 0), (0, Hp - H)))

    out = pl.pallas_call(
        _paa_kernel,
        out_shape=jax.ShapeDtypeStruct((Bp, Lrp, Hp), jnp.float32),
        grid_spec=pltpu.PrefetchScalarGridSpec(
            num_scalar_prefetch=0,
            grid=(Bp // BB,),
            in_specs=[
                pl.BlockSpec((Hp, Hp), lambda i: (0, 0)),          # W
                pl.BlockSpec((1, Hp), lambda i: (0, 0)),           # bias
                pl.BlockSpec((BB, Lpp, Hp), lambda i: (i, 0, 0)),  # product_repr^T
                pl.BlockSpec((BB, 1), lambda i: (i, 0)),           # product lengths
                pl.BlockSpec((BB, Lrp, Hp), lambda i: (i, 0, 0)),  # review_repr^T
                pl.BlockSpec((BB, 1), lambda i: (i, 0)),           # review lengths
            ],
            out_specs=pl.BlockSpec((BB, Lrp, Hp), lambda i: (i, 0, 0)),
        ),
        compiler_params=pltpu.CompilerParams(
            dimension_semantics=("parallel",)),
    )(w_p, b_p, prT, plen, rvT, rlen)

    return out[:B, :Lr, :H]


def _reference(w, b, product_repr, product_mask, review_repr, review_mask):
    # pure-JAX reference mirroring the PyTorch forward exactly
    p = jnp.einsum("bhp,hk->bpk", product_repr, w) + b[None]    # (B, Lp, H)
    p = jax.nn.relu(p)
    q = jnp.einsum("bpk,bkr->bpr", p, review_repr)              # (B, Lp, Lr)
    pm = product_mask[:, :, None].astype(jnp.float32)
    q = q * pm + (1.0 - pm) * (-1e23)
    q = jax.nn.softmax(q, axis=1)
    r = jnp.einsum("bhp,bpr->bhr", product_repr, q) + review_repr
    r = jnp.transpose(r, (0, 2, 1))                             # (B, Lr, H)
    rm = review_mask[:, :, None].astype(jnp.float32)
    return r * rm


if __name__ == "__main__":
    B, H, Lp, Lr = 2, 32, 16, 24

    key = jax.random.PRNGKey(0)
    kw, kb, kp, kr = jax.random.split(key, 4)

    # xavier_uniform init (deterministic, in-script)
    w_bound = math.sqrt(6.0 / (H + H))
    b_bound = math.sqrt(6.0 / (H + H))
    w = jax.random.uniform(kw, (H, H), jnp.float32, -w_bound, w_bound)
    b = jax.random.uniform(kb, (1, H), jnp.float32, -b_bound, b_bound)

    product_repr = jax.random.normal(kp, (B, H, Lp), jnp.float32)
    review_repr = jax.random.normal(kr, (B, H, Lr), jnp.float32)

    # unpadding masks: True = valid token (prefix masks, as in the torch model)
    p_lens = jnp.array([Lp, Lp - 5])
    r_lens = jnp.array([Lr - 3, Lr])
    product_mask = jnp.arange(Lp)[None, :] < p_lens[:, None]
    review_mask = jnp.arange(Lr)[None, :] < r_lens[:, None]

    out = product_aware_attention(w, b, product_repr, product_mask,
                                  review_repr, review_mask)
    out = jax.block_until_ready(out)

    ref = _reference(w, b, product_repr, product_mask, review_repr, review_mask)
    assert out.shape == (B, Lr, H)
    # Tolerance accounts for the EUP approximate reciprocal in the softmax
    # normalization (pl.reciprocal(..., approx=True)); values are O(1).
    assert jnp.allclose(out, ref, atol=5e-3, rtol=5e-3), "mismatch vs reference"

    print("KERNEL_OK")
</pallas_src>

<mosaic_0001>
module attributes {stable_mosaic.version = 11 : i64} {
  func.func @_paa_kernel(%arg0: i32, %arg1: memref<128x128xf32, #tpu.memory_space<vmem>>, %arg2: memref<1x128xf32, #tpu.memory_space<vmem>>, %arg3: memref<8x16x128xf32, #tpu.memory_space<vmem>>, %arg4: memref<8x1xi32, #tpu.memory_space<vmem>>, %arg5: memref<8x24x128xf32, #tpu.memory_space<vmem>>, %arg6: memref<8x1xi32, #tpu.memory_space<vmem>>, %arg7: memref<8x24x128xf32, #tpu.memory_space<vmem>>) attributes {dimension_semantics = [#tpu.dimension_semantics<parallel>], iteration_bounds = array<i64: 1>, scalar_prefetch = 0 : i64, scratch_operands = 0 : i64, tpu.core_type = #tpu.core_type<tc>, window_params = [{pipeline_mode = #tpu.pipeline_mode<synchronous>, transform_indices = @transform_0, window_bounds = array<i64: 128, 128>}, {pipeline_mode = #tpu.pipeline_mode<synchronous>, transform_indices = @transform_1, window_bounds = array<i64: 1, 128>}, {transform_indices = @transform_2, window_bounds = array<i64: 8, 16, 128>}, {transform_indices = @transform_3, window_bounds = array<i64: 8, 1>}, {transform_indices = @transform_4, window_bounds = array<i64: 8, 24, 128>}, {transform_indices = @transform_5, window_bounds = array<i64: 8, 1>}, {transform_indices = @transform_6, window_bounds = array<i64: 8, 24, 128>}]} {
    %c0 = arith.constant 0 : index
    %c0_0 = arith.constant 0 : index
    %c0_1 = arith.constant 0 : index
    %0 = vector.load %arg3[%c0, %c0_0, %c0_1] : memref<8x16x128xf32, #tpu.memory_space<vmem>>, vector<8x16x128xf32>
    %c0_2 = arith.constant 0 : index
    %c0_3 = arith.constant 0 : index
    %c0_4 = arith.constant 0 : index
    %1 = vector.load %arg5[%c0_2, %c0_3, %c0_4] : memref<8x24x128xf32, #tpu.memory_space<vmem>>, vector<8x24x128xf32>
    %2 = vector.shape_cast %0 : vector<8x16x128xf32> to vector<128x128xf32>
    %c0_5 = arith.constant 0 : index
    %c0_6 = arith.constant 0 : index
    %3 = vector.load %arg1[%c0_5, %c0_6] : memref<128x128xf32, #tpu.memory_space<vmem>>, vector<128x128xf32>
    %cst = arith.constant dense<0.000000e+00> : vector<128x128xf32>
    %4 = tpu.matmul %2, %3, %cst {dimension_numbers = #tpu.dot_dimension_numbers<[1], [0], [0], [1], [0, 0, 1, 1], [], []>} : vector<128x128xf32>, vector<128x128xf32>, vector<128x128xf32> -> vector<128x128xf32>
    %c0_7 = arith.constant 0 : index
    %c0_8 = arith.constant 0 : index
    %5 = vector.load %arg2[%c0_7, %c0_8] : memref<1x128xf32, #tpu.memory_space<vmem>>, vector<1x128xf32>
    %6 = vector.broadcast %5 : vector<1x128xf32> to vector<128x128xf32>
    %7 = arith.addf %4, %6 : vector<128x128xf32>
    %cst_9 = arith.constant 0.000000e+00 : f32
    %8 = vector.broadcast %cst_9 : f32 to vector<128x128xf32>
    %9 = arith.maximumf %7, %8 : vector<128x128xf32>
    %10 = vector.shape_cast %9 : vector<128x128xf32> to vector<8x16x128xf32>
    %cst_10 = arith.constant dense<0.000000e+00> : vector<8x24x16xf32>
    %11 = tpu.matmul %1, %10, %cst_10 {dimension_numbers = #tpu.dot_dimension_numbers<[2], [2], [1], [1], [0, 0, 0, 1, 1, 1], [0], [0]>} : vector<8x24x128xf32>, vector<8x16x128xf32>, vector<8x24x16xf32> -> vector<8x24x16xf32>
    %12 = tpu.iota {dimensions = array<i32: 2>} : vector<8x1x16xi32>
    %c0_11 = arith.constant 0 : index
    %c0_12 = arith.constant 0 : index
    %13 = vector.load %arg4[%c0_11, %c0_12] : memref<8x1xi32, #tpu.memory_space<vmem>>, vector<8x1xi32>
    %14 = vector.shape_cast %13 : vector<8x1xi32> to vector<8x1x1xi32>
    %15 = vector.broadcast %14 : vector<8x1x1xi32> to vector<8x1x16xi32>
    %16 = arith.cmpi slt, %12, %15 : vector<8x1x16xi32>
    %cst_13 = arith.constant -9.99999977E+22 : f32
    %17 = vector.shape_cast %16 : vector<8x1x16xi1> to vector<8x1x16xi1>
    %18 = vector.broadcast %17 : vector<8x1x16xi1> to vector<8x24x16xi1>
    %19 = vector.broadcast %cst_13 : f32 to vector<8x24x16xf32>
    %20 = arith.select %18, %11, %19 : vector<8x24x16xi1>, vector<8x24x16xf32>
    %cst_14 = arith.constant dense<0xFF800000> : vector<8x24xf32>
    %21 = vector.multi_reduction <maximumf>, %20, %cst_14 [2] : vector<8x24x16xf32> to vector<8x24xf32>
    %22 = vector.shape_cast %21 : vector<8x24xf32> to vector<8x24x1xf32>
    %23 = vector.broadcast %22 : vector<8x24x1xf32> to vector<8x24x16xf32>
    %24 = arith.subf %20, %23 : vector<8x24x16xf32>
    %25 = math.exp %24 : vector<8x24x16xf32>
    %cst_15 = arith.constant dense<0.000000e+00> : vector<8x24xf32>
    %26 = vector.multi_reduction <add>, %25, %cst_15 [2] : vector<8x24x16xf32> to vector<8x24xf32>
    %27 = vector.shape_cast %26 : vector<8x24xf32> to vector<8x24x1xf32>
    %28 = tpu.reciprocal %27 {approx = true} : vector<8x24x1xf32> -> vector<8x24x1xf32>
    %29 = vector.broadcast %28 : vector<8x24x1xf32> to vector<8x24x16xf32>
    %30 = arith.mulf %25, %29 : vector<8x24x16xf32>
    %cst_16 = arith.constant dense<0.000000e+00> : vector<8x24x128xf32>
    %31 = tpu.matmul %30, %0, %cst_16 {dimension_numbers = #tpu.dot_dimension_numbers<[2], [1], [1], [2], [0, 0, 0, 1, 1, 2], [0], [0]>} : vector<8x24x16xf32>, vector<8x16x128xf32>, vector<8x24x128xf32> -> vector<8x24x128xf32>
    %32 = arith.addf %31, %1 : vector<8x24x128xf32>
    %33 = tpu.iota {dimensions = array<i32: 1>} : vector<8x24x1xi32>
    %c0_17 = arith.constant 0 : index
    %c0_18 = arith.constant 0 : index
    %34 = vector.load %arg6[%c0_17, %c0_18] : memref<8x1xi32, #tpu.memory_space<vmem>>, vector<8x1xi32>
    %35 = vector.shape_cast %34 : vector<8x1xi32> to vector<8x1x1xi32>
    %36 = vector.broadcast %35 : vector<8x1x1xi32> to vector<8x24x1xi32>
    %37 = arith.cmpi slt, %33, %36 : vector<8x24x1xi32>
    %cst_19 = arith.constant 0.000000e+00 : f32
    %38 = vector.shape_cast %37 : vector<8x24x1xi1> to vector<8x24x1xi1>
    %39 = vector.broadcast %38 : vector<8x24x1xi1> to vector<8x24x128xi1>
    %40 = vector.broadcast %cst_19 : f32 to vector<8x24x128xf32>
    %41 = arith.select %39, %32, %40 : vector<8x24x128xi1>, vector<8x24x128xf32>
    %c0_20 = arith.constant 0 : index
    %c0_21 = arith.constant 0 : index
    %c0_22 = arith.constant 0 : index
    %42 = vector.load %arg7[%c0_20, %c0_21, %c0_22] : memref<8x24x128xf32, #tpu.memory_space<vmem>>, vector<8x24x128xf32>
    tpu.vector_store %arg7[%c0_20, %c0_21, %c0_22], %41 {strides = array<i32>} : memref<8x24x128xf32, #tpu.memory_space<vmem>>, vector<8x24x128xf32>,
    return
  }
  func.func @transform_0(%arg0: i32) -> (i32, i32) {
    %c0_i32 = arith.constant 0 : i32
    %c0_i32_0 = arith.constant 0 : i32
    %c0_i32_1 = arith.constant 0 : i32
    return %c0_i32, %c0_i32_0 : i32, i32
  }
  func.func @transform_1(%arg0: i32) -> (i32, i32) {
    %c0_i32 = arith.constant 0 : i32
    %c0_i32_0 = arith.constant 0 : i32
    %c0_i32_1 = arith.constant 0 : i32
    return %c0_i32, %c0_i32_0 : i32, i32
  }
  func.func @transform_2(%arg0: i32) -> (i32, i32, i32) {
    %c0_i32 = arith.constant 0 : i32
    %c0_i32_0 = arith.constant 0 : i32
    %c0_i32_1 = arith.constant 0 : i32
    return %arg0, %c0_i32, %c0_i32_0 : i32, i32, i32
  }
  func.func @transform_3(%arg0: i32) -> (i32, i32) {
    %c0_i32 = arith.constant 0 : i32
    %c0_i32_0 = arith.constant 0 : i32
    return %arg0, %c0_i32 : i32, i32
  }
  func.func @transform_4(%arg0: i32) -> (i32, i32, i32) {
    %c0_i32 = arith.constant 0 : i32
    %c0_i32_0 = arith.constant 0 : i32
    %c0_i32_1 = arith.constant 0 : i32
    return %arg0, %c0_i32, %c0_i32_0 : i32, i32, i32
  }
  func.func @transform_5(%arg0: i32) -> (i32, i32) {
    %c0_i32 = arith.constant 0 : i32
    %c0_i32_0 = arith.constant 0 : i32
    return %arg0, %c0_i32 : i32, i32
  }
  func.func @transform_6(%arg0: i32) -> (i32, i32, i32) {
    %c0_i32 = arith.constant 0 : i32
    %c0_i32_0 = arith.constant 0 : i32
    %c0_i32_1 = arith.constant 0 : i32
    return %arg0, %c0_i32, %c0_i32_0 : i32, i32, i32
  }
}

</mosaic_0001>

<llo_original>
// kernel: tpu_custom_call.1
$region0: #{tpu_custom_call.1}
  #allocation0 [shape = 'u32[]', space=smem, size = 0x4, offset = 0x4, fixed_abs, tag = 'smem constant byte address 0x4 - core index']
  #allocation1 [shape = 'u32[144,128]{1,0:T(1,128)}', space=vmem, size = 0x12000, scoped, tag = 'internal scratch']
  %s0 = inlined_call_operand.hbm [shape: f32[128,128], index: 0, kind: input, shape index: {}]
  %s1 = inlined_call_operand.vmem [shape: f32[1,128], index: 1, kind: input, shape index: {}]
  %s2 = inlined_call_operand.hbm [shape: f32[8,16,128], index: 2, kind: input, shape index: {}]
  %s3 = inlined_call_operand.vmem [shape: s32[8,1], index: 3, kind: input, shape index: {}]
  %s4 = inlined_call_operand.hbm [shape: f32[8,24,128], index: 4, kind: input, shape index: {}]
  %s5 = inlined_call_operand.vmem [shape: s32[8,1], index: 5, kind: input, shape index: {}]
  %s6 = inlined_call_operand.hbm [shape: f32[8,24,128], index: 6, kind: output, shape index: {}]
  %s7 = sld [smem:[#allocation0]]
  $region46: #{tpu_custom_call.1} parent=0
    _
  %s9 = ssub.s32 1, %s7
  %s10 = scalar_select 0, %s9, %s7
  $region1: #{tpu_custom_call.1} parent=0
    #allocation2 [shape = 'u8[65536]{0}', space=vmem, size = 0x10000, scoped, tag = 'input window, operand 0, single buffered']
    #allocation3 [shape = 's32[1]{0}', space=sflag, size = 0x4, scoped, tag = 'scoped memory for tpu_custom_call.1']
    #allocation4 [shape = 's32[1]{0}', space=sflag, size = 0x4, scoped, tag = 'scoped memory for tpu_custom_call.1']
    #allocation5 [shape = 'u8[65536]{0}', space=vmem, size = 0x10000, scoped, tag = 'input window, operand 2, single buffered']
    #allocation6 [shape = 's32[1]{0}', space=sflag, size = 0x4, scoped, tag = 'scoped memory for tpu_custom_call.1']
    #allocation7 [shape = 'u8[98304]{0}', space=vmem, size = 0x18000, scoped, tag = 'input window, operand 4, single buffered']
    #allocation8 [shape = 'u8[98304]{0}', space=vmem, size = 0x18000, scoped, tag = 'output window, operand 0, single buffered']
    %11 = vsyncpa [#allocation3], 0
    %12 = vsyncpa [#allocation6], 0
    %13 = vsyncpa [#allocation4], 0
    // Predicated region
    $region2: #{tpu_custom_call.1} parent=1 // pred_check
      _
    $region3: #{tpu_custom_call.1} parent=1 // pred_check_branch
      %15 = sbr.rel (0) target = $region5
    $region4: #{tpu_custom_call.1} parent=1 // pred_region
      %s17 = ssub.s32 2048, 2048
      %18 = vsyncadd [#allocation3], %s17
      %s19 = sshll.u32 [#allocation2], 4
      %s20 = int_to_ptr.vmem [resolvable:$true] %s19
      %25 = dma.hbm_to_vmem [thread:$0]  %s0, 2048, %s20, [#allocation3], 128, 128, 8
    $region5: #{tpu_custom_call.1} parent=1 // pred_fallthru
      _
    // Predicated region
    $region6: #{tpu_custom_call.1} parent=1 // pred_check
      _
    $region7: #{tpu_custom_call.1} parent=1 // pred_check_branch
      %27 = sbr.rel (0) target = $region9
    $region8: #{tpu_custom_call.1} parent=1 // pred_region
      _
    $region9: #{tpu_custom_call.1} parent=1 // pred_fallthru
      _
    // Predicated region
    $region10: #{tpu_custom_call.1} parent=1 // pred_check
      _
    $region11: #{tpu_custom_call.1} parent=1 // pred_check_branch
      %29 = sbr.rel (0) target = $region13
    $region12: #{tpu_custom_call.1} parent=1 // pred_region
      %s31 = ssub.s32 2048, 2048
      %32 = vsyncadd [#allocation6], %s31
      %s33 = sshll.u32 [#allocation5], 4
      %s34 = int_to_ptr.vmem [resolvable:$true] %s33
      %39 = dma.hbm_to_vmem [thread:$0]  %s2, 2048, %s34, [#allocation6], 128, 128, 8
    $region13: #{tpu_custom_call.1} parent=1 // pred_fallthru
      _
    // Predicated region
    $region14: #{tpu_custom_call.1} parent=1 // pred_check
      _
    $region15: #{tpu_custom_call.1} parent=1 // pred_check_branch
      %41 = sbr.rel (0) target = $region17
    $region16: #{tpu_custom_call.1} parent=1 // pred_region
      _
    $region17: #{tpu_custom_call.1} parent=1 // pred_fallthru
      _
    // Predicated region
    $region18: #{tpu_custom_call.1} parent=1 // pred_check
      _
    $region19: #{tpu_custom_call.1} parent=1 // pred_check_branch
      %43 = sbr.rel (0) target = $region21
    $region20: #{tpu_custom_call.1} parent=1 // pred_region
      %s45 = ssub.s32 3072, 3072
      %46 = vsyncadd [#allocation6], %s45
      %s47 = sshll.u32 [#allocation7], 4
      %s48 = int_to_ptr.vmem [resolvable:$true] %s47
      %53 = dma.hbm_to_vmem [thread:$0]  %s4, 3072, %s48, [#allocation6], 128, 128, 8
    $region21: #{tpu_custom_call.1} parent=1 // pred_fallthru
      _
    // Predicated region
    $region22: #{tpu_custom_call.1} parent=1 // pred_check
      _
    $region23: #{tpu_custom_call.1} parent=1 // pred_check_branch
      %55 = sbr.rel (0) target = $region25
    $region24: #{tpu_custom_call.1} parent=1 // pred_region
      _
    $region25: #{tpu_custom_call.1} parent=1 // pred_fallthru
      _
    // Predicated region
    $region26: #{tpu_custom_call.1} parent=1 // pred_check
      _
    $region27: #{tpu_custom_call.1} parent=1 // pred_check_branch
      %57 = sbr.rel (0) target = $region29
    $region28: #{tpu_custom_call.1} parent=1 // pred_region
      %58 = dma.done [#allocation3], 2048
    $region29: #{tpu_custom_call.1} parent=1 // pred_fallthru
      _
    // Predicated region
    $region30: #{tpu_custom_call.1} parent=1 // pred_check
      _
    $region31: #{tpu_custom_call.1} parent=1 // pred_check_branch
      %60 = sbr.rel (0) target = $region33
    $region32: #{tpu_custom_call.1} parent=1 // pred_region
      %61 = dma.done [#allocation6], 2048
    $region33: #{tpu_custom_call.1} parent=1 // pred_fallthru
      _
    // Predicated region
    $region34: #{tpu_custom_call.1} parent=1 // pred_check
      _
    $region35: #{tpu_custom_call.1} parent=1 // pred_check_branch
      %63 = sbr.rel (0) target = $region37
    $region36: #{tpu_custom_call.1} parent=1 // pred_region
      %64 = dma.done [#allocation6], 3072
    $region37: #{tpu_custom_call.1} parent=1 // pred_fallthru
      _
    %v65 = vld [vmem:[#allocation5] sm:$0xff]
    %v66 = vld [vmem:[#allocation5 + $0x8] sm:$0xff]
    %v67 = vld [vmem:[#allocation5 + $0x10] sm:$0xff]
    %v68 = vld [vmem:[#allocation5 + $0x18] sm:$0xff]
    %v69 = vld [vmem:[#allocation5 + $0x20] sm:$0xff]
    %v70 = vld [vmem:[#allocation5 + $0x28] sm:$0xff]
    %v71 = vld [vmem:[#allocation5 + $0x30] sm:$0xff]
    %v72 = vld [vmem:[#allocation5 + $0x38] sm:$0xff]
    %v73 = vld [vmem:[#allocation5 + $0x40] sm:$0xff]
    %v74 = vld [vmem:[#allocation5 + $0x48] sm:$0xff]
    %v75 = vld [vmem:[#allocation5 + $0x50] sm:$0xff]
    %v76 = vld [vmem:[#allocation5 + $0x58] sm:$0xff]
    %v77 = vld [vmem:[#allocation5 + $0x60] sm:$0xff]
    %v78 = vld [vmem:[#allocation5 + $0x68] sm:$0xff]
    %v79 = vld [vmem:[#allocation5 + $0x70] sm:$0xff]
    %v80 = vld [vmem:[#allocation5 + $0x78] sm:$0xff]
    %v81 = vld [vmem:[#allocation7] sm:$0xff]
    %v82 = vld [vmem:[#allocation7 + $0x8] sm:$0xff]
    %v83 = vld [vmem:[#allocation7 + $0x10] sm:$0xff]
    %v84 = vld [vmem:[#allocation7 + $0x18] sm:$0xff]
    %v85 = vld [vmem:[#allocation7 + $0x20] sm:$0xff]
    %v86 = vld [vmem:[#allocation7 + $0x28] sm:$0xff]
    %v87 = vld [vmem:[#allocation7 + $0x30] sm:$0xff]
    %v88 = vld [vmem:[#allocation7 + $0x38] sm:$0xff]
    %v89 = vld [vmem:[#allocation7 + $0x40] sm:$0xff]
    %v90 = vld [vmem:[#allocation7 + $0x48] sm:$0xff]
    %v91 = vld [vmem:[#allocation7 + $0x50] sm:$0xff]
    %v92 = vld [vmem:[#allocation7 + $0x58] sm:$0xff]
    %v93 = vld [vmem:[#allocation7 + $0x60] sm:$0xff]
    %v94 = vld [vmem:[#allocation7 + $0x68] sm:$0xff]
    %v95 = vld [vmem:[#allocation7 + $0x70] sm:$0xff]
    %v96 = vld [vmem:[#allocation7 + $0x78] sm:$0xff]
    %v97 = vld [vmem:[#allocation7 + $0x80] sm:$0xff]
    %v98 = vld [vmem:[#allocation7 + $0x88] sm:$0xff]
    %v99 = vld [vmem:[#allocation7 + $0x90] sm:$0xff]
    %v100 = vld [vmem:[#allocation7 + $0x98] sm:$0xff]
    %v101 = vld [vmem:[#allocation7 + $0xa0] sm:$0xff]
    %v102 = vld [vmem:[#allocation7 + $0xa8] sm:$0xff]
    %v103 = vld [vmem:[#allocation7 + $0xb0] sm:$0xff]
    %v104 = vld [vmem:[#allocation7 + $0xb8] sm:$0xff]
    %v105 = vld [vmem:[#allocation2] sm:$0xff]
    %v106 = vld [vmem:[#allocation2 + $0x8] sm:$0xff]
    %v107 = vld [vmem:[#allocation2 + $0x10] sm:$0xff]
    %v108 = vld [vmem:[#allocation2 + $0x18] sm:$0xff]
    %v109 = vld [vmem:[#allocation2 + $0x20] sm:$0xff]
    %v110 = vld [vmem:[#allocation2 + $0x28] sm:$0xff]
    %v111 = vld [vmem:[#allocation2 + $0x30] sm:$0xff]
    %v112 = vld [vmem:[#allocation2 + $0x38] sm:$0xff]
    %v113 = vld [vmem:[#allocation2 + $0x40] sm:$0xff]
    %v114 = vld [vmem:[#allocation2 + $0x48] sm:$0xff]
    %v115 = vld [vmem:[#allocation2 + $0x50] sm:$0xff]
    %v116 = vld [vmem:[#allocation2 + $0x58] sm:$0xff]
    %v117 = vld [vmem:[#allocation2 + $0x60] sm:$0xff]
    %v118 = vld [vmem:[#allocation2 + $0x68] sm:$0xff]
    %v119 = vld [vmem:[#allocation2 + $0x70] sm:$0xff]
    %v120 = vld [vmem:[#allocation2 + $0x78] sm:$0xff]
    %v121 = vld [vmem:[%s1] sm:$0x1]
    %v123 = vlaneseq
    %v124 = vshrl.u32 %v123, 7
    %v125 = vsub.s32 0, %v124
    %v126 = vrot.slane %v121, %v125
    %128 = vmatprep.subr.mxu0 0.0
    %129 = vmatpush1.msra.mxu0 %v105
    %130 = vmatprep.subr.mxu0 0.0
    %131 = vmatpush1.msra.mxu0 %v106
    %132 = vmatprep.subr.mxu0 0.0
    %133 = vmatpush1.msra.mxu0 %v107
    %134 = vmatprep.subr.mxu0 0.0
    %135 = vmatpush1.msra.mxu0 %v108
    %136 = vmatprep.subr.mxu0 0.0
    %137 = vmatpush1.msra.mxu0 %v109
    %138 = vmatprep.subr.mxu0 0.0
    %139 = vmatpush1.msra.mxu0 %v110
    %140 = vmatprep.subr.mxu0 0.0
    %141 = vmatpush1.msra.mxu0 %v111
    %142 = vmatprep.subr.mxu0 0.0
    %143 = vmatpush1.msra.mxu0 %v112
    %144 = vmatprep.subr.mxu0 0.0
    %145 = vmatpush1.msra.mxu0 %v113
    %146 = vmatprep.subr.mxu0 0.0
    %147 = vmatpush1.msra.mxu0 %v114
    %148 = vmatprep.subr.mxu0 0.0
    %149 = vmatpush1.msra.mxu0 %v115
    %150 = vmatprep.subr.mxu0 0.0
    %151 = vmatpush1.msra.mxu0 %v116
    %152 = vmatprep.subr.mxu0 0.0
    %153 = vmatpush1.msra.mxu0 %v117
    %154 = vmatprep.subr.mxu0 0.0
    %155 = vmatpush1.msra.mxu0 %v118
    %156 = vmatprep.subr.mxu0 0.0
    %157 = vmatpush1.msra.mxu0 %v119
    %158 = vmatprep.subr.mxu0 0.0
    %159 = vmatpush1.msra.mxu0 %v120
    %160 = vmatprep.subr.mxu0 0.0
    %161 = vmatpush1.msra.mxu0 0.0
    %162 = vmatprep.subr.mxu0 0.0
    %163 = vmatpush1.msra.mxu0 0.0
    %164 = vmatprep.subr.mxu0 0.0
    %165 = vmatpush1.msra.mxu0 0.0
    %166 = vmatprep.subr.mxu0 0.0
    %167 = vmatpush1.msra.mxu0 0.0
    %168 = vmatprep.subr.mxu0 0.0
    %169 = vmatpush1.msra.mxu0 0.0
    %170 = vmatprep.subr.mxu0 0.0
    %171 = vmatpush1.msra.mxu0 0.0
    %172 = vmatprep.subr.mxu0 0.0
    %173 = vmatpush1.msra.mxu0 0.0
    %174 = vmatprep.subr.mxu0 0.0
    %175 = vmatpush1.msra.mxu0 0.0
    %176 = vmatprep.subr.mxu0 0.0
    %177 = vmatpush1.msra.mxu0 0.0
    %178 = vmatprep.subr.mxu0 0.0
    %179 = vmatpush1.msra.mxu0 0.0
    %180 = vmatprep.subr.mxu0 0.0
    %181 = vmatpush1.msra.mxu0 0.0
    %182 = vmatprep.subr.mxu0 0.0
    %183 = vmatpush1.msra.mxu0 0.0
    %184 = vmatprep.subr.mxu0 0.0
    %185 = vmatpush1.msra.mxu0 0.0
    %186 = vmatprep.subr.mxu0 0.0
    %187 = vmatpush1.msra.mxu0 0.0
    %188 = vmatprep.subr.mxu0 0.0
    %189 = vmatpush1.msra.mxu0 0.0
    %190 = vmatprep.subr.mxu0 0.0
    %191 = vmatpush1.msra.mxu0 0.0
    %192 = vmatprep.mubr.f32.mxu0 0.0
    %193 = vmatmul.mubr.f32.gmra.mrb[0].mxu0 %v65
    %v194 = vpop.f32.mrb[0].mxu0
    %v195 = vadd.f32 %v126, %v194
    %v196 = vpop.f32.mrb[0].mxu0
    %197 = vmatprep.mubr.f32.mxu0 0.0
    %198 = vmatmul.mubr.f32.gmra.mrb[0].mxu0 %v66
    %v199 = vpop.f32.mrb[0].mxu0
    %v200 = vadd.f32 %v126, %v199
    %v201 = vpop.f32.mrb[0].mxu0
    %202 = vmatprep.mubr.f32.mxu0 0.0
    %203 = vmatmul.mubr.f32.gmra.mrb[0].mxu0 %v67
    %v204 = vpop.f32.mrb[0].mxu0
    %v205 = vadd.f32 %v126, %v204
    %v206 = vpop.f32.mrb[0].mxu0
    %207 = vmatprep.mubr.f32.mxu0 0.0
    %208 = vmatmul.mubr.f32.gmra.mrb[0].mxu0 %v68
    %v209 = vpop.f32.mrb[0].mxu0
    %v210 = vadd.f32 %v126, %v209
    %v211 = vpop.f32.mrb[0].mxu0
    %212 = vmatprep.mubr.f32.mxu0 0.0
    %213 = vmatmul.mubr.f32.gmra.mrb[0].mxu0 %v69
    %v214 = vpop.f32.mrb[0].mxu0
    %v215 = vadd.f32 %v126, %v214
    %v216 = vpop.f32.mrb[0].mxu0
    %217 = vmatprep.mubr.f32.mxu0 0.0
    %218 = vmatmul.mubr.f32.gmra.mrb[0].mxu0 %v70
    %v219 = vpop.f32.mrb[0].mxu0
    %v220 = vadd.f32 %v126, %v219
    %v221 = vpop.f32.mrb[0].mxu0
    %222 = vmatprep.mubr.f32.mxu0 0.0
    %223 = vmatmul.mubr.f32.gmra.mrb[0].mxu0 %v71
    %v224 = vpop.f32.mrb[0].mxu0
    %v225 = vadd.f32 %v126, %v224
    %v226 = vpop.f32.mrb[0].mxu0
    %227 = vmatprep.mubr.f32.mxu0 0.0
    %228 = vmatmul.mubr.f32.gmra.mrb[0].mxu0 %v72
    %v229 = vpop.f32.mrb[0].mxu0
    %v230 = vadd.f32 %v126, %v229
    %v231 = vpop.f32.mrb[0].mxu0
    %232 = vmatprep.mubr.f32.mxu0 0.0
    %233 = vmatmul.mubr.f32.gmra.mrb[0].mxu0 %v73
    %v234 = vpop.f32.mrb[0].mxu0
    %v235 = vadd.f32 %v126, %v234
    %v236 = vpop.f32.mrb[0].mxu0
    %237 = vmatprep.mubr.f32.mxu0 0.0
    %238 = vmatmul.mubr.f32.gmra.mrb[0].mxu0 %v74
    %v239 = vpop.f32.mrb[0].mxu0
    %v240 = vadd.f32 %v126, %v239
    %v241 = vpop.f32.mrb[0].mxu0
    %242 = vmatprep.mubr.f32.mxu0 0.0
    %243 = vmatmul.mubr.f32.gmra.mrb[0].mxu0 %v75
    %v244 = vpop.f32.mrb[0].mxu0
    %v245 = vadd.f32 %v126, %v244
    %v246 = vpop.f32.mrb[0].mxu0
    %247 = vmatprep.mubr.f32.mxu0 0.0
    %248 = vmatmul.mubr.f32.gmra.mrb[0].mxu0 %v76
    %v249 = vpop.f32.mrb[0].mxu0
    %v250 = vadd.f32 %v126, %v249
    %v251 = vpop.f32.mrb[0].mxu0
    %252 = vmatprep.mubr.f32.mxu0 0.0
    %253 = vmatmul.mubr.f32.gmra.mrb[0].mxu0 %v77
    %v254 = vpop.f32.mrb[0].mxu0
    %v255 = vadd.f32 %v126, %v254
    %v256 = vpop.f32.mrb[0].mxu0
    %257 = vmatprep.mubr.f32.mxu0 0.0
    %258 = vmatmul.mubr.f32.gmra.mrb[0].mxu0 %v78
    %v259 = vpop.f32.mrb[0].mxu0
    %v260 = vadd.f32 %v126, %v259
    %v261 = vpop.f32.mrb[0].mxu0
    %262 = vmatprep.mubr.f32.mxu0 0.0
    %263 = vmatmul.mubr.f32.gmra.mrb[0].mxu0 %v79
    %v264 = vpop.f32.mrb[0].mxu0
    %v265 = vadd.f32 %v126, %v264
    %v266 = vpop.f32.mrb[0].mxu0
    %267 = vmatprep.mubr.f32.mxu0 0.0
    %268 = vmatmul.mubr.f32.gmra.mrb[0].mxu0 %v80
    %v269 = vpop.f32.mrb[0].mxu0
    %v270 = vadd.f32 %v126, %v269
    %v271 = vpop.f32.mrb[0].mxu0
    %272 = vdwg.mxu0
    %v273 = vmax.f32 %v195, 0.0
    %v274 = vmax.f32 %v200, 0.0
    %v275 = vmax.f32 %v205, 0.0
    %v276 = vmax.f32 %v210, 0.0
    %v277 = vmax.f32 %v215, 0.0
    %v278 = vmax.f32 %v220, 0.0
    %v279 = vmax.f32 %v225, 0.0
    %v280 = vmax.f32 %v230, 0.0
    %v281 = vmax.f32 %v235, 0.0
    %v282 = vmax.f32 %v240, 0.0
    %v283 = vmax.f32 %v245, 0.0
    %v284 = vmax.f32 %v250, 0.0
    %v285 = vmax.f32 %v255, 0.0
    %v286 = vmax.f32 %v260, 0.0
    %v287 = vmax.f32 %v265, 0.0
    %v288 = vmax.f32 %v270, 0.0
    %289 = vmatprep.subr.mxu0 0.0
    %290 = vmatpush1.xpose.msra.mxu0 %v273
    %291 = vmatprep.subr.mxu0 0.0
    %292 = vmatpush1.xpose.msra.mxu0 %v274
    %293 = vmatprep.subr.mxu0 0.0
    %294 = vmatpush1.xpose.msra.mxu0 0.0
    %295 = vmatprep.subr.mxu0 0.0
    %296 = vmatpush1.xpose.msra.mxu0 0.0
    %297 = vmatprep.subr.mxu0 0.0
    %298 = vmatpush1.xpose.msra.mxu0 0.0
    %299 = vmatprep.subr.mxu0 0.0
    %300 = vmatpush1.xpose.msra.mxu0 0.0
    %301 = vmatprep.subr.mxu0 0.0
    %302 = vmatpush1.xpose.msra.mxu0 0.0
    %303 = vmatprep.subr.mxu0 0.0
    %304 = vmatpush1.xpose.msra.mxu0 0.0
    %305 = vmatprep.subr.mxu0 0.0
    %306 = vmatpush1.xpose.msra.mxu0 0.0
    %307 = vmatprep.subr.mxu0 0.0
    %308 = vmatpush1.xpose.msra.mxu0 0.0
    %309 = vmatprep.subr.mxu0 0.0
    %310 = vmatpush1.xpose.msra.mxu0 0.0
    %311 = vmatprep.subr.mxu0 0.0
    %312 = vmatpush1.xpose.msra.mxu0 0.0
    %313 = vmatprep.subr.mxu0 0.0
    %314 = vmatpush1.xpose.msra.mxu0 0.0
    %315 = vmatprep.subr.mxu0 0.0
    %316 = vmatpush1.xpose.msra.mxu0 0.0
    %317 = vmatprep.subr.mxu0 0.0
    %318 = vmatpush1.xpose.msra.mxu0 0.0
    %319 = vmatprep.subr.mxu0 0.0
    %320 = vmatpush1.xpose.msra.mxu0 0.0
    %321 = vmatprep.subr.mxu0 0.0
    %322 = vmatpush1.xpose.msra.mxu0 0.0
    %323 = vmatprep.subr.mxu0 0.0
    %324 = vmatpush1.xpose.msra.mxu0 0.0
    %325 = vmatprep.subr.mxu0 0.0
    %326 = vmatpush1.xpose.msra.mxu0 0.0
    %327 = vmatprep.subr.mxu0 0.0
    %328 = vmatpush1.xpose.msra.mxu0 0.0
    %329 = vmatprep.subr.mxu0 0.0
    %330 = vmatpush1.xpose.msra.mxu0 0.0
    %331 = vmatprep.subr.mxu0 0.0
    %332 = vmatpush1.xpose.msra.mxu0 0.0
    %333 = vmatprep.subr.mxu0 0.0
    %334 = vmatpush1.xpose.msra.mxu0 0.0
    %335 = vmatprep.subr.mxu0 0.0
    %336 = vmatpush1.xpose.msra.mxu0 0.0
    %337 = vmatprep.subr.mxu0 0.0
    %338 = vmatpush1.xpose.msra.mxu0 0.0
    %339 = vmatprep.subr.mxu0 0.0
    %340 = vmatpush1.xpose.msra.mxu0 0.0
    %341 = vmatprep.subr.mxu0 0.0
    %342 = vmatpush1.xpose.msra.mxu0 0.0
    %343 = vmatprep.subr.mxu0 0.0
    %344 = vmatpush1.xpose.msra.mxu0 0.0
    %345 = vmatprep.subr.mxu0 0.0
    %346 = vmatpush1.xpose.msra.mxu0 0.0
    %347 = vmatprep.subr.mxu0 0.0
    %348 = vmatpush1.xpose.msra.mxu0 0.0
    %349 = vmatprep.subr.mxu0 0.0
    %350 = vmatpush1.xpose.msra.mxu0 0.0
    %351 = vmatprep.subr.mxu0 0.0
    %352 = vmatpush1.xpose.msra.mxu0 0.0
    %353 = vmatprep.mubr.f32.mxu0 0.0
    %354 = vmatmul.mubr.f32.gmra.mrb[0].mxu0 %v81
    %v355 = vpop.f32.mrb[0].mxu0
    %v356 = vadd.f32 0.0, %v355
    %v357 = vpop.f32.mrb[0].mxu0
    %358 = vmatprep.mubr.f32.mxu0 0.0
    %359 = vmatmul.mubr.f32.gmra.mrb[0].mxu0 %v82
    %v360 = vpop.f32.mrb[0].mxu0
    %v361 = vadd.f32 0.0, %v360
    %v362 = vpop.f32.mrb[0].mxu0
    %363 = vmatprep.mubr.f32.mxu0 0.0
    %364 = vmatmul.mubr.f32.gmra.mrb[0].mxu0 %v83
    %v365 = vpop.f32.mrb[0].mxu0
    %v366 = vadd.f32 0.0, %v365
    %v367 = vpop.f32.mrb[0].mxu0
    %368 = vdwg.mxu0
    %369 = vmatprep.subr.mxu0 0.0
    %370 = vmatpush1.xpose.msra.mxu0 %v275
    %371 = vmatprep.subr.mxu0 0.0
    %372 = vmatpush1.xpose.msra.mxu0 %v276
    %373 = vmatprep.subr.mxu0 0.0
    %374 = vmatpush1.xpose.msra.mxu0 0.0
    %375 = vmatprep.subr.mxu0 0.0
    %376 = vmatpush1.xpose.msra.mxu0 0.0
    %377 = vmatprep.subr.mxu0 0.0
    %378 = vmatpush1.xpose.msra.mxu0 0.0
    %379 = vmatprep.subr.mxu0 0.0
    %380 = vmatpush1.xpose.msra.mxu0 0.0
    %381 = vmatprep.subr.mxu0 0.0
    %382 = vmatpush1.xpose.msra.mxu0 0.0
    %383 = vmatprep.subr.mxu0 0.0
    %384 = vmatpush1.xpose.msra.mxu0 0.0
    %385 = vmatprep.subr.mxu0 0.0
    %386 = vmatpush1.xpose.msra.mxu0 0.0
    %387 = vmatprep.subr.mxu0 0.0
    %388 = vmatpush1.xpose.msra.mxu0 0.0
    %389 = vmatprep.subr.mxu0 0.0
    %390 = vmatpush1.xpose.msra.mxu0 0.0
    %391 = vmatprep.subr.mxu0 0.0
    %392 = vmatpush1.xpose.msra.mxu0 0.0
    %393 = vmatprep.subr.mxu0 0.0
    %394 = vmatpush1.xpose.msra.mxu0 0.0
    %395 = vmatprep.subr.mxu0 0.0
    %396 = vmatpush1.xpose.msra.mxu0 0.0
    %397 = vmatprep.subr.mxu0 0.0
    %398 = vmatpush1.xpose.msra.mxu0 0.0
    %399 = vmatprep.subr.mxu0 0.0
    %400 = vmatpush1.xpose.msra.mxu0 0.0
    %401 = vmatprep.subr.mxu0 0.0
    %402 = vmatpush1.xpose.msra.mxu0 0.0
    %403 = vmatprep.subr.mxu0 0.0
    %404 = vmatpush1.xpose.msra.mxu0 0.0
    %405 = vmatprep.subr.mxu0 0.0
    %406 = vmatpush1.xpose.msra.mxu0 0.0
    %407 = vmatprep.subr.mxu0 0.0
    %408 = vmatpush1.xpose.msra.mxu0 0.0
    %409 = vmatprep.subr.mxu0 0.0
    %410 = vmatpush1.xpose.msra.mxu0 0.0
    %411 = vmatprep.subr.mxu0 0.0
    %412 = vmatpush1.xpose.msra.mxu0 0.0
    %413 = vmatprep.subr.mxu0 0.0
    %414 = vmatpush1.xpose.msra.mxu0 0.0
    %415 = vmatprep.subr.mxu0 0.0
    %416 = vmatpush1.xpose.msra.mxu0 0.0
    %417 = vmatprep.subr.mxu0 0.0
    %418 = vmatpush1.xpose.msra.mxu0 0.0
    %419 = vmatprep.subr.mxu0 0.0
    %420 = vmatpush1.xpose.msra.mxu0 0.0
    %421 = vmatprep.subr.mxu0 0.0
    %422 = vmatpush1.xpose.msra.mxu0 0.0
    %423 = vmatprep.subr.mxu0 0.0
    %424 = vmatpush1.xpose.msra.mxu0 0.0
    %425 = vmatprep.subr.mxu0 0.0
    %426 = vmatpush1.xpose.msra.mxu0 0.0
    %427 = vmatprep.subr.mxu0 0.0
    %428 = vmatpush1.xpose.msra.mxu0 0.0
    %429 = vmatprep.subr.mxu0 0.0
    %430 = vmatpush1.xpose.msra.mxu0 0.0
    %431 = vmatprep.subr.mxu0 0.0
    %432 = vmatpush1.xpose.msra.mxu0 0.0
    %433 = vmatprep.mubr.f32.mxu0 0.0
    %434 = vmatmul.mubr.f32.gmra.mrb[0].mxu0 %v84
    %v435 = vpop.f32.mrb[0].mxu0
    %v436 = vadd.f32 0.0, %v435
    %v437 = vpop.f32.mrb[0].mxu0
    %438 = vmatprep.mubr.f32.mxu0 0.0
    %439 = vmatmul.mubr.f32.gmra.mrb[0].mxu0 %v85
    %v440 = vpop.f32.mrb[0].mxu0
    %v441 = vadd.f32 0.0, %v440
    %v442 = vpop.f32.mrb[0].mxu0
    %443 = vmatprep.mubr.f32.mxu0 0.0
    %444 = vmatmul.mubr.f32.gmra.mrb[0].mxu0 %v86
    %v445 = vpop.f32.mrb[0].mxu0
    %v446 = vadd.f32 0.0, %v445
    %v447 = vpop.f32.mrb[0].mxu0
    %448 = vdwg.mxu0
    %449 = vmatprep.subr.mxu0 0.0
    %450 = vmatpush1.xpose.msra.mxu0 %v277
    %451 = vmatprep.subr.mxu0 0.0
    %452 = vmatpush1.xpose.msra.mxu0 %v278
    %453 = vmatprep.subr.mxu0 0.0
    %454 = vmatpush1.xpose.msra.mxu0 0.0
    %455 = vmatprep.subr.mxu0 0.0
    %456 = vmatpush1.xpose.msra.mxu0 0.0
    %457 = vmatprep.subr.mxu0 0.0
    %458 = vmatpush1.xpose.msra.mxu0 0.0
    %459 = vmatprep.subr.mxu0 0.0
    %460 = vmatpush1.xpose.msra.mxu0 0.0
    %461 = vmatprep.subr.mxu0 0.0
    %462 = vmatpush1.xpose.msra.mxu0 0.0
    %463 = vmatprep.subr.mxu0 0.0
    %464 = vmatpush1.xpose.msra.mxu0 0.0
    %465 = vmatprep.subr.mxu0 0.0
    %466 = vmatpush1.xpose.msra.mxu0 0.0
    %467 = vmatprep.subr.mxu0 0.0
    %468 = vmatpush1.xpose.msra.mxu0 0.0
    %469 = vmatprep.subr.mxu0 0.0
    %470 = vmatpush1.xpose.msra.mxu0 0.0
    %471 = vmatprep.subr.mxu0 0.0
    %472 = vmatpush1.xpose.msra.mxu0 0.0
    %473 = vmatprep.subr.mxu0 0.0
    %474 = vmatpush1.xpose.msra.mxu0 0.0
    %475 = vmatprep.subr.mxu0 0.0
    %476 = vmatpush1.xpose.msra.mxu0 0.0
    %477 = vmatprep.subr.mxu0 0.0
    %478 = vmatpush1.xpose.msra.mxu0 0.0
    %479 = vmatprep.subr.mxu0 0.0
    %480 = vmatpush1.xpose.msra.mxu0 0.0
    %481 = vmatprep.subr.mxu0 0.0
    %482 = vmatpush1.xpose.msra.mxu0 0.0
    %483 = vmatprep.subr.mxu0 0.0
    %484 = vmatpush1.xpose.msra.mxu0 0.0
    %485 = vmatprep.subr.mxu0 0.0
    %486 = vmatpush1.xpose.msra.mxu0 0.0
    %487 = vmatprep.subr.mxu0 0.0
    %488 = vmatpush1.xpose.msra.mxu0 0.0
    %489 = vmatprep.subr.mxu0 0.0
    %490 = vmatpush1.xpose.msra.mxu0 0.0
    %491 = vmatprep.subr.mxu0 0.0
    %492 = vmatpush1.xpose.msra.mxu0 0.0
    %493 = vmatprep.subr.mxu0 0.0
    %494 = vmatpush1.xpose.msra.mxu0 0.0
    %495 = vmatprep.subr.mxu0 0.0
    %496 = vmatpush1.xpose.msra.mxu0 0.0
    %497 = vmatprep.subr.mxu0 0.0
    %498 = vmatpush1.xpose.msra.mxu0 0.0
    %499 = vmatprep.subr.mxu0 0.0
    %500 = vmatpush1.xpose.msra.mxu0 0.0
    %501 = vmatprep.subr.mxu0 0.0
    %502 = vmatpush1.xpose.msra.mxu0 0.0
    %503 = vmatprep.subr.mxu0 0.0
    %504 = vmatpush1.xpose.msra.mxu0 0.0
    %505 = vmatprep.subr.mxu0 0.0
    %506 = vmatpush1.xpose.msra.mxu0 0.0
    %507 = vmatprep.subr.mxu0 0.0
    %508 = vmatpush1.xpose.msra.mxu0 0.0
    %509 = vmatprep.subr.mxu0 0.0
    %510 = vmatpush1.xpose.msra.mxu0 0.0
    %511 = vmatprep.subr.mxu0 0.0
    %512 = vmatpush1.xpose.msra.mxu0 0.0
    %513 = vmatprep.mubr.f32.mxu0 0.0
    %514 = vmatmul.mubr.f32.gmra.mrb[0].mxu0 %v87
    %v515 = vpop.f32.mrb[0].mxu0
    %v516 = vadd.f32 0.0, %v515
    %v517 = vpop.f32.mrb[0].mxu0
    %518 = vmatprep.mubr.f32.mxu0 0.0
    %519 = vmatmul.mubr.f32.gmra.mrb[0].mxu0 %v88
    %v520 = vpop.f32.mrb[0].mxu0
    %v521 = vadd.f32 0.0, %v520
    %v522 = vpop.f32.mrb[0].mxu0
    %523 = vmatprep.mubr.f32.mxu0 0.0
    %524 = vmatmul.mubr.f32.gmra.mrb[0].mxu0 %v89
    %v525 = vpop.f32.mrb[0].mxu0
    %v526 = vadd.f32 0.0, %v525
    %v527 = vpop.f32.mrb[0].mxu0
    %528 = vdwg.mxu0
    %529 = vmatprep.subr.mxu0 0.0
    %530 = vmatpush1.xpose.msra.mxu0 %v279
    %531 = vmatprep.subr.mxu0 0.0
    %532 = vmatpush1.xpose.msra.mxu0 %v280
    %533 = vmatprep.subr.mxu0 0.0
    %534 = vmatpush1.xpose.msra.mxu0 0.0
    %535 = vmatprep.subr.mxu0 0.0
    %536 = vmatpush1.xpose.msra.mxu0 0.0
    %537 = vmatprep.subr.mxu0 0.0
    %538 = vmatpush1.xpose.msra.mxu0 0.0
    %539 = vmatprep.subr.mxu0 0.0
    %540 = vmatpush1.xpose.msra.mxu0 0.0
    %541 = vmatprep.subr.mxu0 0.0
    %542 = vmatpush1.xpose.msra.mxu0 0.0
    %543 = vmatprep.subr.mxu0 0.0
    %544 = vmatpush1.xpose.msra.mxu0 0.0
    %545 = vmatprep.subr.mxu0 0.0
    %546 = vmatpush1.xpose.msra.mxu0 0.0
    %547 = vmatprep.subr.mxu0 0.0
    %548 = vmatpush1.xpose.msra.mxu0 0.0
    %549 = vmatprep.subr.mxu0 0.0
    %550 = vmatpush1.xpose.msra.mxu0 0.0
    %551 = vmatprep.subr.mxu0 0.0
    %552 = vmatpush1.xpose.msra.mxu0 0.0
    %553 = vmatprep.subr.mxu0 0.0
    %554 = vmatpush1.xpose.msra.mxu0 0.0
    %555 = vmatprep.subr.mxu0 0.0
    %556 = vmatpush1.xpose.msra.mxu0 0.0
    %557 = vmatprep.subr.mxu0 0.0
    %558 = vmatpush1.xpose.msra.mxu0 0.0
    %559 = vmatprep.subr.mxu0 0.0
    %560 = vmatpush1.xpose.msra.mxu0 0.0
    %561 = vmatprep.subr.mxu0 0.0
    %562 = vmatpush1.xpose.msra.mxu0 0.0
    %563 = vmatprep.subr.mxu0 0.0
    %564 = vmatpush1.xpose.msra.mxu0 0.0
    %565 = vmatprep.subr.mxu0 0.0
    %566 = vmatpush1.xpose.msra.mxu0 0.0
    %567 = vmatprep.subr.mxu0 0.0
    %568 = vmatpush1.xpose.msra.mxu0 0.0
    %569 = vmatprep.subr.mxu0 0.0
    %570 = vmatpush1.xpose.msra.mxu0 0.0
    %571 = vmatprep.subr.mxu0 0.0
    %572 = vmatpush1.xpose.msra.mxu0 0.0
    %573 = vmatprep.subr.mxu0 0.0
    %574 = vmatpush1.xpose.msra.mxu0 0.0
    %575 = vmatprep.subr.mxu0 0.0
    %576 = vmatpush1.xpose.msra.mxu0 0.0
    %577 = vmatprep.subr.mxu0 0.0
    %578 = vmatpush1.xpose.msra.mxu0 0.0
    %579 = vmatprep.subr.mxu0 0.0
    %580 = vmatpush1.xpose.msra.mxu0 0.0
    %581 = vmatprep.subr.mxu0 0.0
    %582 = vmatpush1.xpose.msra.mxu0 0.0
    %583 = vmatprep.subr.mxu0 0.0
    %584 = vmatpush1.xpose.msra.mxu0 0.0
    %585 = vmatprep.subr.mxu0 0.0
    %586 = vmatpush1.xpose.msra.mxu0 0.0
    %587 = vmatprep.subr.mxu0 0.0
    %588 = vmatpush1.xpose.msra.mxu0 0.0
    %589 = vmatprep.subr.mxu0 0.0
    %590 = vmatpush1.xpose.msra.mxu0 0.0
    %591 = vmatprep.subr.mxu0 0.0
    %592 = vmatpush1.xpose.msra.mxu0 0.0
    %593 = vmatprep.mubr.f32.mxu0 0.0
    %594 = vmatmul.mubr.f32.gmra.mrb[0].mxu0 %v90
    %v595 = vpop.f32.mrb[0].mxu0
    %v596 = vadd.f32 0.0, %v595
    %v597 = vpop.f32.mrb[0].mxu0
    %598 = vmatprep.mubr.f32.mxu0 0.0
    %599 = vmatmul.mubr.f32.gmra.mrb[0].mxu0 %v91
    %v600 = vpop.f32.mrb[0].mxu0
    %v601 = vadd.f32 0.0, %v600
    %v602 = vpop.f32.mrb[0].mxu0
    %603 = vmatprep.mubr.f32.mxu0 0.0
    %604 = vmatmul.mubr.f32.gmra.mrb[0].mxu0 %v92
    %v605 = vpop.f32.mrb[0].mxu0
    %v606 = vadd.f32 0.0, %v605
    %v607 = vpop.f32.mrb[0].mxu0
    %608 = vdwg.mxu0
    %609 = vmatprep.subr.mxu0 0.0
    %610 = vmatpush1.xpose.msra.mxu0 %v281
    %611 = vmatprep.subr.mxu0 0.0
    %612 = vmatpush1.xpose.msra.mxu0 %v282
    %613 = vmatprep.subr.mxu0 0.0
    %614 = vmatpush1.xpose.msra.mxu0 0.0
    %615 = vmatprep.subr.mxu0 0.0
    %616 = vmatpush1.xpose.msra.mxu0 0.0
    %617 = vmatprep.subr.mxu0 0.0
    %618 = vmatpush1.xpose.msra.mxu0 0.0
    %619 = vmatprep.subr.mxu0 0.0
    %620 = vmatpush1.xpose.msra.mxu0 0.0
    %621 = vmatprep.subr.mxu0 0.0
    %622 = vmatpush1.xpose.msra.mxu0 0.0
    %623 = vmatprep.subr.mxu0 0.0
    %624 = vmatpush1.xpose.msra.mxu0 0.0
    %625 = vmatprep.subr.mxu0 0.0
    %626 = vmatpush1.xpose.msra.mxu0 0.0
    %627 = vmatprep.subr.mxu0 0.0
    %628 = vmatpush1.xpose.msra.mxu0 0.0
    %629 = vmatprep.subr.mxu0 0.0
    %630 = vmatpush1.xpose.msra.mxu0 0.0
    %631 = vmatprep.subr.mxu0 0.0
    %632 = vmatpush1.xpose.msra.mxu0 0.0
    %633 = vmatprep.subr.mxu0 0.0
    %634 = vmatpush1.xpose.msra.mxu0 0.0
    %635 = vmatprep.subr.mxu0 0.0
    %636 = vmatpush1.xpose.msra.mxu0 0.0
    %637 = vmatprep.subr.mxu0 0.0
    %638 = vmatpush1.xpose.msra.mxu0 0.0
    %639 = vmatprep.subr.mxu0 0.0
    %640 = vmatpush1.xpose.msra.mxu0 0.0
    %641 = vmatprep.subr.mxu0 0.0
    %642 = vmatpush1.xpose.msra.mxu0 0.0
    %643 = vmatprep.subr.mxu0 0.0
    %644 = vmatpush1.xpose.msra.mxu0 0.0
    %645 = vmatprep.subr.mxu0 0.0
    %646 = vmatpush1.xpose.msra.mxu0 0.0
    %647 = vmatprep.subr.mxu0 0.0
    %648 = vmatpush1.xpose.msra.mxu0 0.0
    %649 = vmatprep.subr.mxu0 0.0
    %650 = vmatpush1.xpose.msra.mxu0 0.0
    %651 = vmatprep.subr.mxu0 0.0
    %652 = vmatpush1.xpose.msra.mxu0 0.0
    %653 = vmatprep.subr.mxu0 0.0
    %654 = vmatpush1.xpose.msra.mxu0 0.0
    %655 = vmatprep.subr.mxu0 0.0
    %656 = vmatpush1.xpose.msra.mxu0 0.0
    %657 = vmatprep.subr.mxu0 0.0
    %658 = vmatpush1.xpose.msra.mxu0 0.0
    %659 = vmatprep.subr.mxu0 0.0
    %660 = vmatpush1.xpose.msra.mxu0 0.0
    %661 = vmatprep.subr.mxu0 0.0
    %662 = vmatpush1.xpose.msra.mxu0 0.0
    %663 = vmatprep.subr.mxu0 0.0
    %664 = vmatpush1.xpose.msra.mxu0 0.0
    %665 = vmatprep.subr.mxu0 0.0
    %666 = vmatpush1.xpose.msra.mxu0 0.0
    %667 = vmatprep.subr.mxu0 0.0
    %668 = vmatpush1.xpose.msra.mxu0 0.0
    %669 = vmatprep.subr.mxu0 0.0
    %670 = vmatpush1.xpose.msra.mxu0 0.0
    %671 = vmatprep.subr.mxu0 0.0
    %672 = vmatpush1.xpose.msra.mxu0 0.0
    %673 = vmatprep.mubr.f32.mxu0 0.0
    %674 = vmatmul.mubr.f32.gmra.mrb[0].mxu0 %v93
    %v675 = vpop.f32.mrb[0].mxu0
    %v676 = vadd.f32 0.0, %v675
    %v677 = vpop.f32.mrb[0].mxu0
    %678 = vmatprep.mubr.f32.mxu0 0.0
    %679 = vmatmul.mubr.f32.gmra.mrb[0].mxu0 %v94
    %v680 = vpop.f32.mrb[0].mxu0
    %v681 = vadd.f32 0.0, %v680
    %v682 = vpop.f32.mrb[0].mxu0
    %683 = vmatprep.mubr.f32.mxu0 0.0
    %684 = vmatmul.mubr.f32.gmra.mrb[0].mxu0 %v95
    %v685 = vpop.f32.mrb[0].mxu0
    %v686 = vadd.f32 0.0, %v685
    %v687 = vpop.f32.mrb[0].mxu0
    %688 = vdwg.mxu0
    %689 = vmatprep.subr.mxu0 0.0
    %690 = vmatpush1.xpose.msra.mxu0 %v283
    %691 = vmatprep.subr.mxu0 0.0
    %692 = vmatpush1.xpose.msra.mxu0 %v284
    %693 = vmatprep.subr.mxu0 0.0
    %694 = vmatpush1.xpose.msra.mxu0 0.0
    %695 = vmatprep.subr.mxu0 0.0
    %696 = vmatpush1.xpose.msra.mxu0 0.0
    %697 = vmatprep.subr.mxu0 0.0
    %698 = vmatpush1.xpose.msra.mxu0 0.0
    %699 = vmatprep.subr.mxu0 0.0
    %700 = vmatpush1.xpose.msra.mxu0 0.0
    %701 = vmatprep.subr.mxu0 0.0
    %702 = vmatpush1.xpose.msra.mxu0 0.0
    %703 = vmatprep.subr.mxu0 0.0
    %704 = vmatpush1.xpose.msra.mxu0 0.0
    %705 = vmatprep.subr.mxu0 0.0
    %706 = vmatpush1.xpose.msra.mxu0 0.0
    %707 = vmatprep.subr.mxu0 0.0
    %708 = vmatpush1.xpose.msra.mxu0 0.0
    %709 = vmatprep.subr.mxu0 0.0
    %710 = vmatpush1.xpose.msra.mxu0 0.0
    %711 = vmatprep.subr.mxu0 0.0
    %712 = vmatpush1.xpose.msra.mxu0 0.0
    %713 = vmatprep.subr.mxu0 0.0
    %714 = vmatpush1.xpose.msra.mxu0 0.0
    %715 = vmatprep.subr.mxu0 0.0
    %716 = vmatpush1.xpose.msra.mxu0 0.0
    %717 = vmatprep.subr.mxu0 0.0
    %718 = vmatpush1.xpose.msra.mxu0 0.0
    %719 = vmatprep.subr.mxu0 0.0
    %720 = vmatpush1.xpose.msra.mxu0 0.0
    %721 = vmatprep.subr.mxu0 0.0
    %722 = vmatpush1.xpose.msra.mxu0 0.0
    %723 = vmatprep.subr.mxu0 0.0
    %724 = vmatpush1.xpose.msra.mxu0 0.0
    %725 = vmatprep.subr.mxu0 0.0
    %726 = vmatpush1.xpose.msra.mxu0 0.0
    %727 = vmatprep.subr.mxu0 0.0
    %728 = vmatpush1.xpose.msra.mxu0 0.0
    %729 = vmatprep.subr.mxu0 0.0
    %730 = vmatpush1.xpose.msra.mxu0 0.0
    %731 = vmatprep.subr.mxu0 0.0
    %732 = vmatpush1.xpose.msra.mxu0 0.0
    %733 = vmatprep.subr.mxu0 0.0
    %734 = vmatpush1.xpose.msra.mxu0 0.0
    %735 = vmatprep.subr.mxu0 0.0
    %736 = vmatpush1.xpose.msra.mxu0 0.0
    %737 = vmatprep.subr.mxu0 0.0
    %738 = vmatpush1.xpose.msra.mxu0 0.0
    %739 = vmatprep.subr.mxu0 0.0
    %740 = vmatpush1.xpose.msra.mxu0 0.0
    %741 = vmatprep.subr.mxu0 0.0
    %742 = vmatpush1.xpose.msra.mxu0 0.0
    %743 = vmatprep.subr.mxu0 0.0
    %744 = vmatpush1.xpose.msra.mxu0 0.0
    %745 = vmatprep.subr.mxu0 0.0
    %746 = vmatpush1.xpose.msra.mxu0 0.0
    %747 = vmatprep.subr.mxu0 0.0
    %748 = vmatpush1.xpose.msra.mxu0 0.0
    %749 = vmatprep.subr.mxu0 0.0
    %750 = vmatpush1.xpose.msra.mxu0 0.0
    %751 = vmatprep.subr.mxu0 0.0
    %752 = vmatpush1.xpose.msra.mxu0 0.0
    %753 = vmatprep.mubr.f32.mxu0 0.0
    %754 = vmatmul.mubr.f32.gmra.mrb[0].mxu0 %v96
    %v755 = vpop.f32.mrb[0].mxu0
    %v756 = vadd.f32 0.0, %v755
    %v757 = vpop.f32.mrb[0].mxu0
    %758 = vmatprep.mubr.f32.mxu0 0.0
    %759 = vmatmul.mubr.f32.gmra.mrb[0].mxu0 %v97
    %v760 = vpop.f32.mrb[0].mxu0
    %v761 = vadd.f32 0.0, %v760
    %v762 = vpop.f32.mrb[0].mxu0
    %763 = vmatprep.mubr.f32.mxu0 0.0
    %764 = vmatmul.mubr.f32.gmra.mrb[0].mxu0 %v98
    %v765 = vpop.f32.mrb[0].mxu0
    %v766 = vadd.f32 0.0, %v765
    %v767 = vpop.f32.mrb[0].mxu0
    %768 = vdwg.mxu0
    %769 = vmatprep.subr.mxu0 0.0
    %770 = vmatpush1.xpose.msra.mxu0 %v285
    %771 = vmatprep.subr.mxu0 0.0
    %772 = vmatpush1.xpose.msra.mxu0 %v286
    %773 = vmatprep.subr.mxu0 0.0
    %774 = vmatpush1.xpose.msra.mxu0 0.0
    %775 = vmatprep.subr.mxu0 0.0
    %776 = vmatpush1.xpose.msra.mxu0 0.0
    %777 = vmatprep.subr.mxu0 0.0
    %778 = vmatpush1.xpose.msra.mxu0 0.0
    %779 = vmatprep.subr.mxu0 0.0
    %780 = vmatpush1.xpose.msra.mxu0 0.0
    %781 = vmatprep.subr.mxu0 0.0
    %782 = vmatpush1.xpose.msra.mxu0 0.0
    %783 = vmatprep.subr.mxu0 0.0
    %784 = vmatpush1.xpose.msra.mxu0 0.0
    %785 = vmatprep.subr.mxu0 0.0
    %786 = vmatpush1.xpose.msra.mxu0 0.0
    %787 = vmatprep.subr.mxu0 0.0
    %788 = vmatpush1.xpose.msra.mxu0 0.0
    %789 = vmatprep.subr.mxu0 0.0
    %790 = vmatpush1.xpose.msra.mxu0 0.0
    %791 = vmatprep.subr.mxu0 0.0
    %792 = vmatpush1.xpose.msra.mxu0 0.0
    %793 = vmatprep.subr.mxu0 0.0
    %794 = vmatpush1.xpose.msra.mxu0 0.0
    %795 = vmatprep.subr.mxu0 0.0
    %796 = vmatpush1.xpose.msra.mxu0 0.0
    %797 = vmatprep.subr.mxu0 0.0
    %798 = vmatpush1.xpose.msra.mxu0 0.0
    %799 = vmatprep.subr.mxu0 0.0
    %800 = vmatpush1.xpose.msra.mxu0 0.0
    %801 = vmatprep.subr.mxu0 0.0
    %802 = vmatpush1.xpose.msra.mxu0 0.0
    %803 = vmatprep.subr.mxu0 0.0
    %804 = vmatpush1.xpose.msra.mxu0 0.0
    %805 = vmatprep.subr.mxu0 0.0
    %806 = vmatpush1.xpose.msra.mxu0 0.0
    %807 = vmatprep.subr.mxu0 0.0
    %808 = vmatpush1.xpose.msra.mxu0 0.0
    %809 = vmatprep.subr.mxu0 0.0
    %810 = vmatpush1.xpose.msra.mxu0 0.0
    %811 = vmatprep.subr.mxu0 0.0
    %812 = vmatpush1.xpose.msra.mxu0 0.0
    %813 = vmatprep.subr.mxu0 0.0
    %814 = vmatpush1.xpose.msra.mxu0 0.0
    %815 = vmatprep.subr.mxu0 0.0
    %816 = vmatpush1.xpose.msra.mxu0 0.0
    %817 = vmatprep.subr.mxu0 0.0
    %818 = vmatpush1.xpose.msra.mxu0 0.0
    %819 = vmatprep.subr.mxu0 0.0
    %820 = vmatpush1.xpose.msra.mxu0 0.0
    %821 = vmatprep.subr.mxu0 0.0
    %822 = vmatpush1.xpose.msra.mxu0 0.0
    %823 = vmatprep.subr.mxu0 0.0
    %824 = vmatpush1.xpose.msra.mxu0 0.0
    %825 = vmatprep.subr.mxu0 0.0
    %826 = vmatpush1.xpose.msra.mxu0 0.0
    %827 = vmatprep.subr.mxu0 0.0
    %828 = vmatpush1.xpose.msra.mxu0 0.0
    %829 = vmatprep.subr.mxu0 0.0
    %830 = vmatpush1.xpose.msra.mxu0 0.0
    %831 = vmatprep.subr.mxu0 0.0
    %832 = vmatpush1.xpose.msra.mxu0 0.0
    %833 = vmatprep.mubr.f32.mxu0 0.0
    %834 = vmatmul.mubr.f32.gmra.mrb[0].mxu0 %v99
    %v835 = vpop.f32.mrb[0].mxu0
    %v836 = vadd.f32 0.0, %v835
    %v837 = vpop.f32.mrb[0].mxu0
    %838 = vmatprep.mubr.f32.mxu0 0.0
    %839 = vmatmul.mubr.f32.gmra.mrb[0].mxu0 %v100
    %v840 = vpop.f32.mrb[0].mxu0
    %v841 = vadd.f32 0.0, %v840
    %v842 = vpop.f32.mrb[0].mxu0
    %843 = vmatprep.mubr.f32.mxu0 0.0
    %844 = vmatmul.mubr.f32.gmra.mrb[0].mxu0 %v101
    %v845 = vpop.f32.mrb[0].mxu0
    %v846 = vadd.f32 0.0, %v845
    %v847 = vpop.f32.mrb[0].mxu0
    %848 = vdwg.mxu0
    %849 = vmatprep.subr.mxu0 0.0
    %850 = vmatpush1.xpose.msra.mxu0 %v287
    %851 = vmatprep.subr.mxu0 0.0
    %852 = vmatpush1.xpose.msra.mxu0 %v288
    %853 = vmatprep.subr.mxu0 0.0
    %854 = vmatpush1.xpose.msra.mxu0 0.0
    %855 = vmatprep.subr.mxu0 0.0
    %856 = vmatpush1.xpose.msra.mxu0 0.0
    %857 = vmatprep.subr.mxu0 0.0
    %858 = vmatpush1.xpose.msra.mxu0 0.0
    %859 = vmatprep.subr.mxu0 0.0
    %860 = vmatpush1.xpose.msra.mxu0 0.0
    %861 = vmatprep.subr.mxu0 0.0
    %862 = vmatpush1.xpose.msra.mxu0 0.0
    %863 = vmatprep.subr.mxu0 0.0
    %864 = vmatpush1.xpose.msra.mxu0 0.0
    %865 = vmatprep.subr.mxu0 0.0
    %866 = vmatpush1.xpose.msra.mxu0 0.0
    %867 = vmatprep.subr.mxu0 0.0
    %868 = vmatpush1.xpose.msra.mxu0 0.0
    %869 = vmatprep.subr.mxu0 0.0
    %870 = vmatpush1.xpose.msra.mxu0 0.0
    %871 = vmatprep.subr.mxu0 0.0
    %872 = vmatpush1.xpose.msra.mxu0 0.0
    %873 = vmatprep.subr.mxu0 0.0
    %874 = vmatpush1.xpose.msra.mxu0 0.0
    %875 = vmatprep.subr.mxu0 0.0
    %876 = vmatpush1.xpose.msra.mxu0 0.0
    %877 = vmatprep.subr.mxu0 0.0
    %878 = vmatpush1.xpose.msra.mxu0 0.0
    %879 = vmatprep.subr.mxu0 0.0
    %880 = vmatpush1.xpose.msra.mxu0 0.0
    %881 = vmatprep.subr.mxu0 0.0
    %882 = vmatpush1.xpose.msra.mxu0 0.0
    %883 = vmatprep.subr.mxu0 0.0
    %884 = vmatpush1.xpose.msra.mxu0 0.0
    %885 = vmatprep.subr.mxu0 0.0
    %886 = vmatpush1.xpose.msra.mxu0 0.0
    %887 = vmatprep.subr.mxu0 0.0
    %888 = vmatpush1.xpose.msra.mxu0 0.0
    %889 = vmatprep.subr.mxu0 0.0
    %890 = vmatpush1.xpose.msra.mxu0 0.0
    %891 = vmatprep.subr.mxu0 0.0
    %892 = vmatpush1.xpose.msra.mxu0 0.0
    %893 = vmatprep.subr.mxu0 0.0
    %894 = vmatpush1.xpose.msra.mxu0 0.0
    %895 = vmatprep.subr.mxu0 0.0
    %896 = vmatpush1.xpose.msra.mxu0 0.0
    %897 = vmatprep.subr.mxu0 0.0
    %898 = vmatpush1.xpose.msra.mxu0 0.0
    %899 = vmatprep.subr.mxu0 0.0
    %900 = vmatpush1.xpose.msra.mxu0 0.0
    %901 = vmatprep.subr.mxu0 0.0
    %902 = vmatpush1.xpose.msra.mxu0 0.0
    %903 = vmatprep.subr.mxu0 0.0
    %904 = vmatpush1.xpose.msra.mxu0 0.0
    %905 = vmatprep.subr.mxu0 0.0
    %906 = vmatpush1.xpose.msra.mxu0 0.0
    %907 = vmatprep.subr.mxu0 0.0
    %908 = vmatpush1.xpose.msra.mxu0 0.0
    %909 = vmatprep.subr.mxu0 0.0
    %910 = vmatpush1.xpose.msra.mxu0 0.0
    %911 = vmatprep.subr.mxu0 0.0
    %912 = vmatpush1.xpose.msra.mxu0 0.0
    %913 = vmatprep.mubr.f32.mxu0 0.0
    %914 = vmatmul.mubr.f32.gmra.mrb[0].mxu0 %v102
    %v915 = vpop.f32.mrb[0].mxu0
    %v916 = vadd.f32 0.0, %v915
    %v917 = vpop.f32.mrb[0].mxu0
    %918 = vmatprep.mubr.f32.mxu0 0.0
    %919 = vmatmul.mubr.f32.gmra.mrb[0].mxu0 %v103
    %v920 = vpop.f32.mrb[0].mxu0
    %v921 = vadd.f32 0.0, %v920
    %v922 = vpop.f32.mrb[0].mxu0
    %923 = vmatprep.mubr.f32.mxu0 0.0
    %924 = vmatmul.mubr.f32.gmra.mrb[0].mxu0 %v104
    %v925 = vpop.f32.mrb[0].mxu0
    %v926 = vadd.f32 0.0, %v925
    %v927 = vpop.f32.mrb[0].mxu0
    %928 = vdwg.mxu0
    %v929 = vlaneseq
    %v930 = vand.u32 %v929, 127
    %v931 = vld [vmem:[%s3] sm:$0xff]
    %v932 = vcombine.high %v931, %v931
    %v934 = vunpack.c.l.s4 1966171168
    %v935 = vunpack.c.0.s8 %v934
    %v936 = vlaneseq
    %v937 = vshrl.u32 %v936, 7
    %v938 = vsub.s32 %v935, %v937
    %v939 = vrot.slane %v931, %v938
    %v941 = vunpack.c.l.s4 1966171168
    %v942 = vunpack.c.0.s8 %v941
    %v943 = vlaneseq
    %v944 = vshrl.u32 %v943, 7
    %v945 = vsub.s32 %v942, %v944
    %v946 = vrot.slane %v932, %v945
    %v947 = vcombine.high %v939, %v939
    %v948 = vcombine.high %v946, %v946
    %v950 = vunpack.c.l.s4 1966171168
    %v951 = vunpack.c.0.s8 %v950
    %v952 = vlaneseq
    %v953 = vshrl.u32 %v952, 7
    %v954 = vsub.s32 %v951, %v953
    %v955 = vrot.slane %v939, %v954
    %v957 = vunpack.c.l.s4 1966171168
    %v958 = vunpack.c.0.s8 %v957
    %v959 = vlaneseq
    %v960 = vshrl.u32 %v959, 7
    %v961 = vsub.s32 %v958, %v960
    %v962 = vrot.slane %v946, %v961
    %v964 = vunpack.c.l.s4 1966171168
    %v965 = vunpack.c.0.s8 %v964
    %v966 = vlaneseq
    %v967 = vshrl.u32 %v966, 7
    %v968 = vsub.s32 %v965, %v967
    %v969 = vrot.slane %v947, %v968
    %v971 = vunpack.c.l.s4 1966171168
    %v972 = vunpack.c.0.s8 %v971
    %v973 = vlaneseq
    %v974 = vshrl.u32 %v973, 7
    %v975 = vsub.s32 %v972, %v974
    %v976 = vrot.slane %v948, %v975
    %v977 = vcombine.high %v955, %v955
    %v978 = vcombine.high %v962, %v962
    %v979 = vcombine.high %v969, %v969
    %v980 = vcombine.high %v976, %v976
    %981 = vset.pattern.permute.xlu0 0
    %982 = vperm.xlu0 %981, %v955
    %v983 = vpop.permute.xlu0 %982
    %v984 = vlaneseq
    %v985 = vshrl.u32 %v984, 7
    %v986 = vsub.s32 0, %v985
    %v987 = vrot.slane %v983, %v986
    %988 = vset.pattern.permute.xlu0 0
    %989 = vperm.xlu0 %988, %v969
    %v990 = vpop.permute.xlu0 %989
    %v991 = vlaneseq
    %v992 = vshrl.u32 %v991, 7
    %v993 = vsub.s32 0, %v992
    %v994 = vrot.slane %v990, %v993
    %995 = vset.pattern.permute.xlu0 0
    %996 = vperm.xlu0 %995, %v977
    %v997 = vpop.permute.xlu0 %996
    %v998 = vlaneseq
    %v999 = vshrl.u32 %v998, 7
    %v1000 = vsub.s32 0, %v999
    %v1001 = vrot.slane %v997, %v1000
    %1002 = vset.pattern.permute.xlu0 0
    %1003 = vperm.xlu0 %1002, %v979
    %v1004 = vpop.permute.xlu0 %1003
    %v1005 = vlaneseq
    %v1006 = vshrl.u32 %v1005, 7
    %v1007 = vsub.s32 0, %v1006
    %v1008 = vrot.slane %v1004, %v1007
    %1009 = vset.pattern.permute.xlu0 0
    %1010 = vperm.xlu0 %1009, %v962
    %v1011 = vpop.permute.xlu0 %1010
    %v1012 = vlaneseq
    %v1013 = vshrl.u32 %v1012, 7
    %v1014 = vsub.s32 0, %v1013
    %v1015 = vrot.slane %v1011, %v1014
    %1016 = vset.pattern.permute.xlu0 0
    %1017 = vperm.xlu0 %1016, %v976
    %v1018 = vpop.permute.xlu0 %1017
    %v1019 = vlaneseq
    %v1020 = vshrl.u32 %v1019, 7
    %v1021 = vsub.s32 0, %v1020
    %v1022 = vrot.slane %v1018, %v1021
    %1023 = vset.pattern.permute.xlu0 0
    %1024 = vperm.xlu0 %1023, %v978
    %v1025 = vpop.permute.xlu0 %1024
    %v1026 = vlaneseq
    %v1027 = vshrl.u32 %v1026, 7
    %v1028 = vsub.s32 0, %v1027
    %v1029 = vrot.slane %v1025, %v1028
    %1030 = vset.pattern.permute.xlu0 0
    %1031 = vperm.xlu0 %1030, %v980
    %v1032 = vpop.permute.xlu0 %1031
    %v1033 = vlaneseq
    %v1034 = vshrl.u32 %v1033, 7
    %v1035 = vsub.s32 0, %v1034
    %v1036 = vrot.slane %v1032, %v1035
    %vm1037 = vcmp.lt.s32.totalorder %v930, %v987
    %vm1038 = vcmp.lt.s32.totalorder %v930, %v994
    %vm1039 = vcmp.lt.s32.totalorder %v930, %v1001
    %vm1040 = vcmp.lt.s32.totalorder %v930, %v1008
    %vm1041 = vcmp.lt.s32.totalorder %v930, %v1015
    %vm1042 = vcmp.lt.s32.totalorder %v930, %v1022
    %vm1043 = vcmp.lt.s32.totalorder %v930, %v1029
    %vm1044 = vcmp.lt.s32.totalorder %v930, %v1036
    %v1045 = vsel %vm1037, 1, 0
    %v1046 = vsel %vm1038, 1, 0
    %v1047 = vsel %vm1039, 1, 0
    %v1048 = vsel %vm1040, 1, 0
    %v1049 = vsel %vm1041, 1, 0
    %v1050 = vsel %vm1042, 1, 0
    %v1051 = vsel %vm1043, 1, 0
    %v1052 = vsel %vm1044, 1, 0
    %vm1053 = vcmp.eq.s32.totalorder %v1045, 1
    %vm1054 = vcmp.eq.s32.totalorder %v1046, 1
    %vm1055 = vcmp.eq.s32.totalorder %v1047, 1
    %vm1056 = vcmp.eq.s32.totalorder %v1048, 1
    %vm1057 = vcmp.eq.s32.totalorder %v1049, 1
    %vm1058 = vcmp.eq.s32.totalorder %v1050, 1
    %vm1059 = vcmp.eq.s32.totalorder %v1051, 1
    %vm1060 = vcmp.eq.s32.totalorder %v1052, 1
    %v1061 = vsel %vm1053, %v356, -1e+23
    %v1062 = vsel %vm1053, %v361, -1e+23
    %v1063 = vsel %vm1053, %v366, -1e+23
    %v1064 = vsel %vm1054, %v436, -1e+23
    %v1065 = vsel %vm1054, %v441, -1e+23
    %v1066 = vsel %vm1054, %v446, -1e+23
    %v1067 = vsel %vm1055, %v516, -1e+23
    %v1068 = vsel %vm1055, %v521, -1e+23
    %v1069 = vsel %vm1055, %v526, -1e+23
    %v1070 = vsel %vm1056, %v596, -1e+23
    %v1071 = vsel %vm1056, %v601, -1e+23
    %v1072 = vsel %vm1056, %v606, -1e+23
    %v1073 = vsel %vm1057, %v676, -1e+23
    %v1074 = vsel %vm1057, %v681, -1e+23
    %v1075 = vsel %vm1057, %v686, -1e+23
    %v1076 = vsel %vm1058, %v756, -1e+23
    %v1077 = vsel %vm1058, %v761, -1e+23
    %v1078 = vsel %vm1058, %v766, -1e+23
    %v1079 = vsel %vm1059, %v836, -1e+23
    %v1080 = vsel %vm1059, %v841, -1e+23
    %v1081 = vsel %vm1059, %v846, -1e+23
    %v1082 = vsel %vm1060, %v916, -1e+23
    %v1083 = vsel %vm1060, %v921, -1e+23
    %v1084 = vsel %vm1060, %v926, -1e+23
    %vm1085 = vcmask 130048
    %v1086 = vsel %vm1085, %v1061, -inf
    %1087 = vmax.xlane.f32.xlu0 %v1086
    %v1088 = vpop.xlane.xlu0 %1087
    %v1089 = vsel %vm1085, %v1062, -inf
    %1090 = vmax.xlane.f32.xlu0 %v1089
    %v1091 = vpop.xlane.xlu0 %1090
    %v1092 = vsel %vm1085, %v1063, -inf
    %1093 = vmax.xlane.f32.xlu0 %v1092
    %v1094 = vpop.xlane.xlu0 %1093
    %v1095 = vsel %vm1085, %v1064, -inf
    %1096 = vmax.xlane.f32.xlu0 %v1095
    %v1097 = vpop.xlane.xlu0 %1096
    %v1098 = vsel %vm1085, %v1065, -inf
    %1099 = vmax.xlane.f32.xlu0 %v1098
    %v1100 = vpop.xlane.xlu0 %1099
    %v1101 = vsel %vm1085, %v1066, -inf
    %1102 = vmax.xlane.f32.xlu0 %v1101
    %v1103 = vpop.xlane.xlu0 %1102
    %v1104 = vsel %vm1085, %v1067, -inf
    %1105 = vmax.xlane.f32.xlu0 %v1104
    %v1106 = vpop.xlane.xlu0 %1105
    %v1107 = vsel %vm1085, %v1068, -inf
    %1108 = vmax.xlane.f32.xlu0 %v1107
    %v1109 = vpop.xlane.xlu0 %1108
    %v1110 = vsel %vm1085, %v1069, -inf
    %1111 = vmax.xlane.f32.xlu0 %v1110
    %v1112 = vpop.xlane.xlu0 %1111
    %v1113 = vsel %vm1085, %v1070, -inf
    %1114 = vmax.xlane.f32.xlu0 %v1113
    %v1115 = vpop.xlane.xlu0 %1114
    %v1116 = vsel %vm1085, %v1071, -inf
    %1117 = vmax.xlane.f32.xlu0 %v1116
    %v1118 = vpop.xlane.xlu0 %1117
    %v1119 = vsel %vm1085, %v1072, -inf
    %1120 = vmax.xlane.f32.xlu0 %v1119
    %v1121 = vpop.xlane.xlu0 %1120
    %v1122 = vsel %vm1085, %v1073, -inf
    %1123 = vmax.xlane.f32.xlu0 %v1122
    %v1124 = vpop.xlane.xlu0 %1123
    %v1125 = vsel %vm1085, %v1074, -inf
    %1126 = vmax.xlane.f32.xlu0 %v1125
    %v1127 = vpop.xlane.xlu0 %1126
    %v1128 = vsel %vm1085, %v1075, -inf
    %1129 = vmax.xlane.f32.xlu0 %v1128
    %v1130 = vpop.xlane.xlu0 %1129
    %v1131 = vsel %vm1085, %v1076, -inf
    %1132 = vmax.xlane.f32.xlu0 %v1131
    %v1133 = vpop.xlane.xlu0 %1132
    %v1134 = vsel %vm1085, %v1077, -inf
    %1135 = vmax.xlane.f32.xlu0 %v1134
    %v1136 = vpop.xlane.xlu0 %1135
    %v1137 = vsel %vm1085, %v1078, -inf
    %1138 = vmax.xlane.f32.xlu0 %v1137
    %v1139 = vpop.xlane.xlu0 %1138
    %v1140 = vsel %vm1085, %v1079, -inf
    %1141 = vmax.xlane.f32.xlu0 %v1140
    %v1142 = vpop.xlane.xlu0 %1141
    %v1143 = vsel %vm1085, %v1080, -inf
    %1144 = vmax.xlane.f32.xlu0 %v1143
    %v1145 = vpop.xlane.xlu0 %1144
    %v1146 = vsel %vm1085, %v1081, -inf
    %1147 = vmax.xlane.f32.xlu0 %v1146
    %v1148 = vpop.xlane.xlu0 %1147
    %v1149 = vsel %vm1085, %v1082, -inf
    %1150 = vmax.xlane.f32.xlu0 %v1149
    %v1151 = vpop.xlane.xlu0 %1150
    %v1152 = vsel %vm1085, %v1083, -inf
    %1153 = vmax.xlane.f32.xlu0 %v1152
    %v1154 = vpop.xlane.xlu0 %1153
    %v1155 = vsel %vm1085, %v1084, -inf
    %1156 = vmax.xlane.f32.xlu0 %v1155
    %v1157 = vpop.xlane.xlu0 %1156
    %v1158 = vsub.f32 %v1061, %v1088
    %v1159 = vsub.f32 %v1062, %v1091
    %v1160 = vsub.f32 %v1063, %v1094
    %v1161 = vsub.f32 %v1064, %v1097
    %v1162 = vsub.f32 %v1065, %v1100
    %v1163 = vsub.f32 %v1066, %v1103
    %v1164 = vsub.f32 %v1067, %v1106
    %v1165 = vsub.f32 %v1068, %v1109
    %v1166 = vsub.f32 %v1069, %v1112
    %v1167 = vsub.f32 %v1070, %v1115
    %v1168 = vsub.f32 %v1071, %v1118
    %v1169 = vsub.f32 %v1072, %v1121
    %v1170 = vsub.f32 %v1073, %v1124
    %v1171 = vsub.f32 %v1074, %v1127
    %v1172 = vsub.f32 %v1075, %v1130
    %v1173 = vsub.f32 %v1076, %v1133
    %v1174 = vsub.f32 %v1077, %v1136
    %v1175 = vsub.f32 %v1078, %v1139
    %v1176 = vsub.f32 %v1079, %v1142
    %v1177 = vsub.f32 %v1080, %v1145
    %v1178 = vsub.f32 %v1081, %v1148
    %v1179 = vsub.f32 %v1082, %v1151
    %v1180 = vsub.f32 %v1083, %v1154
    %v1181 = vsub.f32 %v1084, %v1157
    %v1182 = vmul.f32 %v1158, 1.442695
    %v1183 = vpow.pop %v1182
    %v1184 = vmul.f32 %v1159, 1.442695
    %v1185 = vpow.pop %v1184
    %v1186 = vmul.f32 %v1160, 1.442695
    %v1187 = vpow.pop %v1186
    %v1188 = vmul.f32 %v1161, 1.442695
    %v1189 = vpow.pop %v1188
    %v1190 = vmul.f32 %v1162, 1.442695
    %v1191 = vpow.pop %v1190
    %v1192 = vmul.f32 %v1163, 1.442695
    %v1193 = vpow.pop %v1192
    %v1194 = vmul.f32 %v1164, 1.442695
    %v1195 = vpow.pop %v1194
    %v1196 = vmul.f32 %v1165, 1.442695
    %v1197 = vpow.pop %v1196
    %v1198 = vmul.f32 %v1166, 1.442695
    %v1199 = vpow.pop %v1198
    %v1200 = vmul.f32 %v1167, 1.442695
    %v1201 = vpow.pop %v1200
    %v1202 = vmul.f32 %v1168, 1.442695
    %v1203 = vpow.pop %v1202
    %v1204 = vmul.f32 %v1169, 1.442695
    %v1205 = vpow.pop %v1204
    %v1206 = vmul.f32 %v1170, 1.442695
    %v1207 = vpow.pop %v1206
    %v1208 = vmul.f32 %v1171, 1.442695
    %v1209 = vpow.pop %v1208
    %v1210 = vmul.f32 %v1172, 1.442695
    %v1211 = vpow.pop %v1210
    %v1212 = vmul.f32 %v1173, 1.442695
    %v1213 = vpow.pop %v1212
    %v1214 = vmul.f32 %v1174, 1.442695
    %v1215 = vpow.pop %v1214
    %v1216 = vmul.f32 %v1175, 1.442695
    %v1217 = vpow.pop %v1216
    %v1218 = vmul.f32 %v1176, 1.442695
    %v1219 = vpow.pop %v1218
    %v1220 = vmul.f32 %v1177, 1.442695
    %v1221 = vpow.pop %v1220
    %v1222 = vmul.f32 %v1178, 1.442695
    %v1223 = vpow.pop %v1222
    %v1224 = vmul.f32 %v1179, 1.442695
    %v1225 = vpow.pop %v1224
    %v1226 = vmul.f32 %v1180, 1.442695
    %v1227 = vpow.pop %v1226
    %v1228 = vmul.f32 %v1181, 1.442695
    %v1229 = vpow.pop %v1228
    %v1230 = vsel %vm1085, %v1183, 0.0
    %1231 = vadd.xlane.f32.xlu0 %v1230
    %v1232 = vpop.xlane.xlu0 %1231
    %v1233 = vsel %vm1085, %v1185, 0.0
    %1234 = vadd.xlane.f32.xlu0 %v1233
    %v1235 = vpop.xlane.xlu0 %1234
    %v1236 = vsel %vm1085, %v1187, 0.0
    %1237 = vadd.xlane.f32.xlu0 %v1236
    %v1238 = vpop.xlane.xlu0 %1237
    %v1239 = vsel %vm1085, %v1189, 0.0
    %1240 = vadd.xlane.f32.xlu0 %v1239
    %v1241 = vpop.xlane.xlu0 %1240
    %v1242 = vsel %vm1085, %v1191, 0.0
    %1243 = vadd.xlane.f32.xlu0 %v1242
    %v1244 = vpop.xlane.xlu0 %1243
    %v1245 = vsel %vm1085, %v1193, 0.0
    %1246 = vadd.xlane.f32.xlu0 %v1245
    %v1247 = vpop.xlane.xlu0 %1246
    %v1248 = vsel %vm1085, %v1195, 0.0
    %1249 = vadd.xlane.f32.xlu0 %v1248
    %v1250 = vpop.xlane.xlu0 %1249
    %v1251 = vsel %vm1085, %v1197, 0.0
    %1252 = vadd.xlane.f32.xlu0 %v1251
    %v1253 = vpop.xlane.xlu0 %1252
    %v1254 = vsel %vm1085, %v1199, 0.0
    %1255 = vadd.xlane.f32.xlu0 %v1254
    %v1256 = vpop.xlane.xlu0 %1255
    %v1257 = vsel %vm1085, %v1201, 0.0
    %1258 = vadd.xlane.f32.xlu0 %v1257
    %v1259 = vpop.xlane.xlu0 %1258
    %v1260 = vsel %vm1085, %v1203, 0.0
    %1261 = vadd.xlane.f32.xlu0 %v1260
    %v1262 = vpop.xlane.xlu0 %1261
    %v1263 = vsel %vm1085, %v1205, 0.0
    %1264 = vadd.xlane.f32.xlu0 %v1263
    %v1265 = vpop.xlane.xlu0 %1264
    %v1266 = vsel %vm1085, %v1207, 0.0
    %1267 = vadd.xlane.f32.xlu0 %v1266
    %v1268 = vpop.xlane.xlu0 %1267
    %v1269 = vsel %vm1085, %v1209, 0.0
    %1270 = vadd.xlane.f32.xlu0 %v1269
    %v1271 = vpop.xlane.xlu0 %1270
    %v1272 = vsel %vm1085, %v1211, 0.0
    %1273 = vadd.xlane.f32.xlu0 %v1272
    %v1274 = vpop.xlane.xlu0 %1273
    %v1275 = vsel %vm1085, %v1213, 0.0
    %1276 = vadd.xlane.f32.xlu0 %v1275
    %v1277 = vpop.xlane.xlu0 %1276
    %v1278 = vsel %vm1085, %v1215, 0.0
    %1279 = vadd.xlane.f32.xlu0 %v1278
    %v1280 = vpop.xlane.xlu0 %1279
    %v1281 = vsel %vm1085, %v1217, 0.0
    %1282 = vadd.xlane.f32.xlu0 %v1281
    %v1283 = vpop.xlane.xlu0 %1282
    %v1284 = vsel %vm1085, %v1219, 0.0
    %1285 = vadd.xlane.f32.xlu0 %v1284
    %v1286 = vpop.xlane.xlu0 %1285
    %v1287 = vsel %vm1085, %v1221, 0.0
    %1288 = vadd.xlane.f32.xlu0 %v1287
    %v1289 = vpop.xlane.xlu0 %1288
    %v1290 = vsel %vm1085, %v1223, 0.0
    %1291 = vadd.xlane.f32.xlu0 %v1290
    %v1292 = vpop.xlane.xlu0 %1291
    %v1293 = vsel %vm1085, %v1225, 0.0
    %1294 = vadd.xlane.f32.xlu0 %v1293
    %v1295 = vpop.xlane.xlu0 %1294
    %v1296 = vsel %vm1085, %v1227, 0.0
    %1297 = vadd.xlane.f32.xlu0 %v1296
    %v1298 = vpop.xlane.xlu0 %1297
    %v1299 = vsel %vm1085, %v1229, 0.0
    %1300 = vadd.xlane.f32.xlu0 %v1299
    %v1301 = vpop.xlane.xlu0 %1300
    %v1302 = vrcp.pop %v1232
    %v1303 = vrcp.pop %v1235
    %v1304 = vrcp.pop %v1238
    %v1305 = vrcp.pop %v1241
    %v1306 = vrcp.pop %v1244
    %v1307 = vrcp.pop %v1247
    %v1308 = vrcp.pop %v1250
    %v1309 = vrcp.pop %v1253
    %v1310 = vrcp.pop %v1256
    %v1311 = vrcp.pop %v1259
    %v1312 = vrcp.pop %v1262
    %v1313 = vrcp.pop %v1265
    %v1314 = vrcp.pop %v1268
    %v1315 = vrcp.pop %v1271
    %v1316 = vrcp.pop %v1274
    %v1317 = vrcp.pop %v1277
    %v1318 = vrcp.pop %v1280
    %v1319 = vrcp.pop %v1283
    %v1320 = vrcp.pop %v1286
    %v1321 = vrcp.pop %v1289
    %v1322 = vrcp.pop %v1292
    %v1323 = vrcp.pop %v1295
    %v1324 = vrcp.pop %v1298
    %v1325 = vrcp.pop %v1301
    %v1326 = vmul.f32 %v1183, %v1302
    %v1327 = vmul.f32 %v1185, %v1303
    %v1328 = vmul.f32 %v1187, %v1304
    %v1329 = vmul.f32 %v1189, %v1305
    %v1330 = vmul.f32 %v1191, %v1306
    %v1331 = vmul.f32 %v1193, %v1307
    %v1332 = vmul.f32 %v1195, %v1308
    %v1333 = vmul.f32 %v1197, %v1309
    %v1334 = vmul.f32 %v1199, %v1310
    %v1335 = vmul.f32 %v1201, %v1311
    %v1336 = vmul.f32 %v1203, %v1312
    %v1337 = vmul.f32 %v1205, %v1313
    %v1338 = vmul.f32 %v1207, %v1314
    %v1339 = vmul.f32 %v1209, %v1315
    %v1340 = vmul.f32 %v1211, %v1316
    %v1341 = vmul.f32 %v1213, %v1317
    %v1342 = vmul.f32 %v1215, %v1318
    %v1343 = vmul.f32 %v1217, %v1319
    %v1344 = vmul.f32 %v1219, %v1320
    %v1345 = vmul.f32 %v1221, %v1321
    %v1346 = vmul.f32 %v1223, %v1322
    %v1347 = vmul.f32 %v1225, %v1323
    %v1348 = vmul.f32 %v1227, %v1324
    %v1349 = vmul.f32 %v1229, %v1325
    %v1351 = vsel %vm1085, %v1326, 0
    %v1354 = vsel %vm1085, %v1327, 0
    %v1357 = vsel %vm1085, %v1328, 0
    %1359 = vmatprep.subr.mxu0 0.0
    %1360 = vmatpush1.msra.mxu0 %v65
    %1361 = vmatprep.subr.mxu0 0.0
    %1362 = vmatpush1.msra.mxu0 %v66
    %1363 = vmatprep.subr.mxu0 0.0
    %1364 = vmatpush1.msra.mxu0 0.0
    %1365 = vmatprep.subr.mxu0 0.0
    %1366 = vmatpush1.msra.mxu0 0.0
    %1367 = vmatprep.subr.mxu0 0.0
    %1368 = vmatpush1.msra.mxu0 0.0
    %1369 = vmatprep.subr.mxu0 0.0
    %1370 = vmatpush1.msra.mxu0 0.0
    %1371 = vmatprep.subr.mxu0 0.0
    %1372 = vmatpush1.msra.mxu0 0.0
    %1373 = vmatprep.subr.mxu0 0.0
    %1374 = vmatpush1.msra.mxu0 0.0
    %1375 = vmatprep.subr.mxu0 0.0
    %1376 = vmatpush1.msra.mxu0 0.0
    %1377 = vmatprep.subr.mxu0 0.0
    %1378 = vmatpush1.msra.mxu0 0.0
    %1379 = vmatprep.subr.mxu0 0.0
    %1380 = vmatpush1.msra.mxu0 0.0
    %1381 = vmatprep.subr.mxu0 0.0
    %1382 = vmatpush1.msra.mxu0 0.0
    %1383 = vmatprep.subr.mxu0 0.0
    %1384 = vmatpush1.msra.mxu0 0.0
    %1385 = vmatprep.subr.mxu0 0.0
    %1386 = vmatpush1.msra.mxu0 0.0
    %1387 = vmatprep.subr.mxu0 0.0
    %1388 = vmatpush1.msra.mxu0 0.0
    %1389 = vmatprep.subr.mxu0 0.0
    %1390 = vmatpush1.msra.mxu0 0.0
    %1391 = vmatprep.subr.mxu0 0.0
    %1392 = vmatpush1.msra.mxu0 0.0
    %1393 = vmatprep.subr.mxu0 0.0
    %1394 = vmatpush1.msra.mxu0 0.0
    %1395 = vmatprep.subr.mxu0 0.0
    %1396 = vmatpush1.msra.mxu0 0.0
    %1397 = vmatprep.subr.mxu0 0.0
    %1398 = vmatpush1.msra.mxu0 0.0
    %1399 = vmatprep.subr.mxu0 0.0
    %1400 = vmatpush1.msra.mxu0 0.0
    %1401 = vmatprep.subr.mxu0 0.0
    %1402 = vmatpush1.msra.mxu0 0.0
    %1403 = vmatprep.subr.mxu0 0.0
    %1404 = vmatpush1.msra.mxu0 0.0
    %1405 = vmatprep.subr.mxu0 0.0
    %1406 = vmatpush1.msra.mxu0 0.0
    %1407 = vmatprep.subr.mxu0 0.0
    %1408 = vmatpush1.msra.mxu0 0.0
    %1409 = vmatprep.subr.mxu0 0.0
    %1410 = vmatpush1.msra.mxu0 0.0
    %1411 = vmatprep.subr.mxu0 0.0
    %1412 = vmatpush1.msra.mxu0 0.0
    %1413 = vmatprep.subr.mxu0 0.0
    %1414 = vmatpush1.msra.mxu0 0.0
    %1415 = vmatprep.subr.mxu0 0.0
    %1416 = vmatpush1.msra.mxu0 0.0
    %1417 = vmatprep.subr.mxu0 0.0
    %1418 = vmatpush1.msra.mxu0 0.0
    %1419 = vmatprep.subr.mxu0 0.0
    %1420 = vmatpush1.msra.mxu0 0.0
    %1421 = vmatprep.subr.mxu0 0.0
    %1422 = vmatpush1.msra.mxu0 0.0
    %1423 = vmatprep.mubr.f32.mxu0 0.0
    %1424 = vmatmul.mubr.f32.gmra.mrb[0].mxu0 %v1351
    %v1425 = vpop.f32.mrb[0].mxu0
    %v1426 = vadd.f32 %v81, %v1425
    %v1427 = vpop.f32.mrb[0].mxu0
    %1428 = vmatprep.mubr.f32.mxu0 0.0
    %1429 = vmatmul.mubr.f32.gmra.mrb[0].mxu0 %v1354
    %v1430 = vpop.f32.mrb[0].mxu0
    %v1431 = vadd.f32 %v82, %v1430
    %v1432 = vpop.f32.mrb[0].mxu0
    %1433 = vmatprep.mubr.f32.mxu0 0.0
    %1434 = vmatmul.mubr.f32.gmra.mrb[0].mxu0 %v1357
    %v1435 = vpop.f32.mrb[0].mxu0
    %v1436 = vadd.f32 %v83, %v1435
    %v1437 = vpop.f32.mrb[0].mxu0
    %1438 = vdwg.mxu0
    %v1440 = vsel %vm1085, %v1329, 0
    %v1443 = vsel %vm1085, %v1330, 0
    %v1446 = vsel %vm1085, %v1331, 0
    %1448 = vmatprep.subr.mxu0 0.0
    %1449 = vmatpush1.msra.mxu0 %v67
    %1450 = vmatprep.subr.mxu0 0.0
    %1451 = vmatpush1.msra.mxu0 %v68
    %1452 = vmatprep.subr.mxu0 0.0
    %1453 = vmatpush1.msra.mxu0 0.0
    %1454 = vmatprep.subr.mxu0 0.0
    %1455 = vmatpush1.msra.mxu0 0.0
    %1456 = vmatprep.subr.mxu0 0.0
    %1457 = vmatpush1.msra.mxu0 0.0
    %1458 = vmatprep.subr.mxu0 0.0
    %1459 = vmatpush1.msra.mxu0 0.0
    %1460 = vmatprep.subr.mxu0 0.0
    %1461 = vmatpush1.msra.mxu0 0.0
    %1462 = vmatprep.subr.mxu0 0.0
    %1463 = vmatpush1.msra.mxu0 0.0
    %1464 = vmatprep.subr.mxu0 0.0
    %1465 = vmatpush1.msra.mxu0 0.0
    %1466 = vmatprep.subr.mxu0 0.0
    %1467 = vmatpush1.msra.mxu0 0.0
    %1468 = vmatprep.subr.mxu0 0.0
    %1469 = vmatpush1.msra.mxu0 0.0
    %1470 = vmatprep.subr.mxu0 0.0
    %1471 = vmatpush1.msra.mxu0 0.0
    %1472 = vmatprep.subr.mxu0 0.0
    %1473 = vmatpush1.msra.mxu0 0.0
    %1474 = vmatprep.subr.mxu0 0.0
    %1475 = vmatpush1.msra.mxu0 0.0
    %1476 = vmatprep.subr.mxu0 0.0
    %1477 = vmatpush1.msra.mxu0 0.0
    %1478 = vmatprep.subr.mxu0 0.0
    %1479 = vmatpush1.msra.mxu0 0.0
    %1480 = vmatprep.subr.mxu0 0.0
    %1481 = vmatpush1.msra.mxu0 0.0
    %1482 = vmatprep.subr.mxu0 0.0
    %1483 = vmatpush1.msra.mxu0 0.0
    %1484 = vmatprep.subr.mxu0 0.0
    %1485 = vmatpush1.msra.mxu0 0.0
    %1486 = vmatprep.subr.mxu0 0.0
    %1487 = vmatpush1.msra.mxu0 0.0
    %1488 = vmatprep.subr.mxu0 0.0
    %1489 = vmatpush1.msra.mxu0 0.0
    %1490 = vmatprep.subr.mxu0 0.0
    %1491 = vmatpush1.msra.mxu0 0.0
    %1492 = vmatprep.subr.mxu0 0.0
    %1493 = vmatpush1.msra.mxu0 0.0
    %1494 = vmatprep.subr.mxu0 0.0
    %1495 = vmatpush1.msra.mxu0 0.0
    %1496 = vmatprep.subr.mxu0 0.0
    %1497 = vmatpush1.msra.mxu0 0.0
    %1498 = vmatprep.subr.mxu0 0.0
    %1499 = vmatpush1.msra.mxu0 0.0
    %1500 = vmatprep.subr.mxu0 0.0
    %1501 = vmatpush1.msra.mxu0 0.0
    %1502 = vmatprep.subr.mxu0 0.0
    %1503 = vmatpush1.msra.mxu0 0.0
    %1504 = vmatprep.subr.mxu0 0.0
    %1505 = vmatpush1.msra.mxu0 0.0
    %1506 = vmatprep.subr.mxu0 0.0
    %1507 = vmatpush1.msra.mxu0 0.0
    %1508 = vmatprep.subr.mxu0 0.0
    %1509 = vmatpush1.msra.mxu0 0.0
    %1510 = vmatprep.subr.mxu0 0.0
    %1511 = vmatpush1.msra.mxu0 0.0
    %1512 = vmatprep.mubr.f32.mxu0 0.0
    %1513 = vmatmul.mubr.f32.gmra.mrb[0].mxu0 %v1440
    %v1514 = vpop.f32.mrb[0].mxu0
    %v1515 = vadd.f32 %v84, %v1514
    %v1516 = vpop.f32.mrb[0].mxu0
    %1517 = vmatprep.mubr.f32.mxu0 0.0
    %1518 = vmatmul.mubr.f32.gmra.mrb[0].mxu0 %v1443
    %v1519 = vpop.f32.mrb[0].mxu0
    %v1520 = vadd.f32 %v85, %v1519
    %v1521 = vpop.f32.mrb[0].mxu0
    %1522 = vmatprep.mubr.f32.mxu0 0.0
    %1523 = vmatmul.mubr.f32.gmra.mrb[0].mxu0 %v1446
    %v1524 = vpop.f32.mrb[0].mxu0
    %v1525 = vadd.f32 %v86, %v1524
    %v1526 = vpop.f32.mrb[0].mxu0
    %1527 = vdwg.mxu0
    %v1529 = vsel %vm1085, %v1332, 0
    %v1532 = vsel %vm1085, %v1333, 0
    %v1535 = vsel %vm1085, %v1334, 0
    %1537 = vmatprep.subr.mxu0 0.0
    %1538 = vmatpush1.msra.mxu0 %v69
    %1539 = vmatprep.subr.mxu0 0.0
    %1540 = vmatpush1.msra.mxu0 %v70
    %1541 = vmatprep.subr.mxu0 0.0
    %1542 = vmatpush1.msra.mxu0 0.0
    %1543 = vmatprep.subr.mxu0 0.0
    %1544 = vmatpush1.msra.mxu0 0.0
    %1545 = vmatprep.subr.mxu0 0.0
    %1546 = vmatpush1.msra.mxu0 0.0
    %1547 = vmatprep.subr.mxu0 0.0
    %1548 = vmatpush1.msra.mxu0 0.0
    %1549 = vmatprep.subr.mxu0 0.0
    %1550 = vmatpush1.msra.mxu0 0.0
    %1551 = vmatprep.subr.mxu0 0.0
    %1552 = vmatpush1.msra.mxu0 0.0
    %1553 = vmatprep.subr.mxu0 0.0
    %1554 = vmatpush1.msra.mxu0 0.0
    %1555 = vmatprep.subr.mxu0 0.0
    %1556 = vmatpush1.msra.mxu0 0.0
    %1557 = vmatprep.subr.mxu0 0.0
    %1558 = vmatpush1.msra.mxu0 0.0
    %1559 = vmatprep.subr.mxu0 0.0
    %1560 = vmatpush1.msra.mxu0 0.0
    %1561 = vmatprep.subr.mxu0 0.0
    %1562 = vmatpush1.msra.mxu0 0.0
    %1563 = vmatprep.subr.mxu0 0.0
    %1564 = vmatpush1.msra.mxu0 0.0
    %1565 = vmatprep.subr.mxu0 0.0
    %1566 = vmatpush1.msra.mxu0 0.0
    %1567 = vmatprep.subr.mxu0 0.0
    %1568 = vmatpush1.msra.mxu0 0.0
    %1569 = vmatprep.subr.mxu0 0.0
    %1570 = vmatpush1.msra.mxu0 0.0
    %1571 = vmatprep.subr.mxu0 0.0
    %1572 = vmatpush1.msra.mxu0 0.0
    %1573 = vmatprep.subr.mxu0 0.0
    %1574 = vmatpush1.msra.mxu0 0.0
    %1575 = vmatprep.subr.mxu0 0.0
    %1576 = vmatpush1.msra.mxu0 0.0
    %1577 = vmatprep.subr.mxu0 0.0
    %1578 = vmatpush1.msra.mxu0 0.0
    %1579 = vmatprep.subr.mxu0 0.0
    %1580 = vmatpush1.msra.mxu0 0.0
    %1581 = vmatprep.subr.mxu0 0.0
    %1582 = vmatpush1.msra.mxu0 0.0
    %1583 = vmatprep.subr.mxu0 0.0
    %1584 = vmatpush1.msra.mxu0 0.0
    %1585 = vmatprep.subr.mxu0 0.0
    %1586 = vmatpush1.msra.mxu0 0.0
    %1587 = vmatprep.subr.mxu0 0.0
    %1588 = vmatpush1.msra.mxu0 0.0
    %1589 = vmatprep.subr.mxu0 0.0
    %1590 = vmatpush1.msra.mxu0 0.0
    %1591 = vmatprep.subr.mxu0 0.0
    %1592 = vmatpush1.msra.mxu0 0.0
    %1593 = vmatprep.subr.mxu0 0.0
    %1594 = vmatpush1.msra.mxu0 0.0
    %1595 = vmatprep.subr.mxu0 0.0
    %1596 = vmatpush1.msra.mxu0 0.0
    %1597 = vmatprep.subr.mxu0 0.0
    %1598 = vmatpush1.msra.mxu0 0.0
    %1599 = vmatprep.subr.mxu0 0.0
    %1600 = vmatpush1.msra.mxu0 0.0
    %1601 = vmatprep.mubr.f32.mxu0 0.0
    %1602 = vmatmul.mubr.f32.gmra.mrb[0].mxu0 %v1529
    %v1603 = vpop.f32.mrb[0].mxu0
    %v1604 = vadd.f32 %v87, %v1603
    %v1605 = vpop.f32.mrb[0].mxu0
    %1606 = vmatprep.mubr.f32.mxu0 0.0
    %1607 = vmatmul.mubr.f32.gmra.mrb[0].mxu0 %v1532
    %v1608 = vpop.f32.mrb[0].mxu0
    %v1609 = vadd.f32 %v88, %v1608
    %v1610 = vpop.f32.mrb[0].mxu0
    %1611 = vmatprep.mubr.f32.mxu0 0.0
    %1612 = vmatmul.mubr.f32.gmra.mrb[0].mxu0 %v1535
    %v1613 = vpop.f32.mrb[0].mxu0
    %v1614 = vadd.f32 %v89, %v1613
    %v1615 = vpop.f32.mrb[0].mxu0
    %1616 = vdwg.mxu0
    %v1618 = vsel %vm1085, %v1335, 0
    %v1621 = vsel %vm1085, %v1336, 0
    %v1624 = vsel %vm1085, %v1337, 0
    %1626 = vmatprep.subr.mxu0 0.0
    %1627 = vmatpush1.msra.mxu0 %v71
    %1628 = vmatprep.subr.mxu0 0.0
    %1629 = vmatpush1.msra.mxu0 %v72
    %1630 = vmatprep.subr.mxu0 0.0
    %1631 = vmatpush1.msra.mxu0 0.0
    %1632 = vmatprep.subr.mxu0 0.0
    %1633 = vmatpush1.msra.mxu0 0.0
    %1634 = vmatprep.subr.mxu0 0.0
    %1635 = vmatpush1.msra.mxu0 0.0
    %1636 = vmatprep.subr.mxu0 0.0
    %1637 = vmatpush1.msra.mxu0 0.0
    %1638 = vmatprep.subr.mxu0 0.0
    %1639 = vmatpush1.msra.mxu0 0.0
    %1640 = vmatprep.subr.mxu0 0.0
    %1641 = vmatpush1.msra.mxu0 0.0
    %1642 = vmatprep.subr.mxu0 0.0
    %1643 = vmatpush1.msra.mxu0 0.0
    %1644 = vmatprep.subr.mxu0 0.0
    %1645 = vmatpush1.msra.mxu0 0.0
    %1646 = vmatprep.subr.mxu0 0.0
    %1647 = vmatpush1.msra.mxu0 0.0
    %1648 = vmatprep.subr.mxu0 0.0
    %1649 = vmatpush1.msra.mxu0 0.0
    %1650 = vmatprep.subr.mxu0 0.0
    %1651 = vmatpush1.msra.mxu0 0.0
    %1652 = vmatprep.subr.mxu0 0.0
    %1653 = vmatpush1.msra.mxu0 0.0
    %1654 = vmatprep.subr.mxu0 0.0
    %1655 = vmatpush1.msra.mxu0 0.0
    %1656 = vmatprep.subr.mxu0 0.0
    %1657 = vmatpush1.msra.mxu0 0.0
    %1658 = vmatprep.subr.mxu0 0.0
    %1659 = vmatpush1.msra.mxu0 0.0
    %1660 = vmatprep.subr.mxu0 0.0
    %1661 = vmatpush1.msra.mxu0 0.0
    %1662 = vmatprep.subr.mxu0 0.0
    %1663 = vmatpush1.msra.mxu0 0.0
    %1664 = vmatprep.subr.mxu0 0.0
    %1665 = vmatpush1.msra.mxu0 0.0
    %1666 = vmatprep.subr.mxu0 0.0
    %1667 = vmatpush1.msra.mxu0 0.0
    %1668 = vmatprep.subr.mxu0 0.0
    %1669 = vmatpush1.msra.mxu0 0.0
    %1670 = vmatprep.subr.mxu0 0.0
    %1671 = vmatpush1.msra.mxu0 0.0
    %1672 = vmatprep.subr.mxu0 0.0
    %1673 = vmatpush1.msra.mxu0 0.0
    %1674 = vmatprep.subr.mxu0 0.0
    %1675 = vmatpush1.msra.mxu0 0.0
    %1676 = vmatprep.subr.mxu0 0.0
    %1677 = vmatpush1.msra.mxu0 0.0
    %1678 = vmatprep.subr.mxu0 0.0
    %1679 = vmatpush1.msra.mxu0 0.0
    %1680 = vmatprep.subr.mxu0 0.0
    %1681 = vmatpush1.msra.mxu0 0.0
    %1682 = vmatprep.subr.mxu0 0.0
    %1683 = vmatpush1.msra.mxu0 0.0
    %1684 = vmatprep.subr.mxu0 0.0
    %1685 = vmatpush1.msra.mxu0 0.0
    %1686 = vmatprep.subr.mxu0 0.0
    %1687 = vmatpush1.msra.mxu0 0.0
    %1688 = vmatprep.subr.mxu0 0.0
    %1689 = vmatpush1.msra.mxu0 0.0
    %1690 = vmatprep.mubr.f32.mxu0 0.0
    %1691 = vmatmul.mubr.f32.gmra.mrb[0].mxu0 %v1618
    %v1692 = vpop.f32.mrb[0].mxu0
    %v1693 = vadd.f32 %v90, %v1692
    %v1694 = vpop.f32.mrb[0].mxu0
    %1695 = vmatprep.mubr.f32.mxu0 0.0
    %1696 = vmatmul.mubr.f32.gmra.mrb[0].mxu0 %v1621
    %v1697 = vpop.f32.mrb[0].mxu0
    %v1698 = vadd.f32 %v91, %v1697
    %v1699 = vpop.f32.mrb[0].mxu0
    %1700 = vmatprep.mubr.f32.mxu0 0.0
    %1701 = vmatmul.mubr.f32.gmra.mrb[0].mxu0 %v1624
    %v1702 = vpop.f32.mrb[0].mxu0
    %v1703 = vadd.f32 %v92, %v1702
    %v1704 = vpop.f32.mrb[0].mxu0
    %1705 = vdwg.mxu0
    %v1707 = vsel %vm1085, %v1338, 0
    %v1710 = vsel %vm1085, %v1339, 0
    %v1713 = vsel %vm1085, %v1340, 0
    %1715 = vmatprep.subr.mxu0 0.0
    %1716 = vmatpush1.msra.mxu0 %v73
    %1717 = vmatprep.subr.mxu0 0.0
    %1718 = vmatpush1.msra.mxu0 %v74
    %1719 = vmatprep.subr.mxu0 0.0
    %1720 = vmatpush1.msra.mxu0 0.0
    %1721 = vmatprep.subr.mxu0 0.0
    %1722 = vmatpush1.msra.mxu0 0.0
    %1723 = vmatprep.subr.mxu0 0.0
    %1724 = vmatpush1.msra.mxu0 0.0
    %1725 = vmatprep.subr.mxu0 0.0
    %1726 = vmatpush1.msra.mxu0 0.0
    %1727 = vmatprep.subr.mxu0 0.0
    %1728 = vmatpush1.msra.mxu0 0.0
    %1729 = vmatprep.subr.mxu0 0.0
    %1730 = vmatpush1.msra.mxu0 0.0
    %1731 = vmatprep.subr.mxu0 0.0
    %1732 = vmatpush1.msra.mxu0 0.0
    %1733 = vmatprep.subr.mxu0 0.0
    %1734 = vmatpush1.msra.mxu0 0.0
    %1735 = vmatprep.subr.mxu0 0.0
    %1736 = vmatpush1.msra.mxu0 0.0
    %1737 = vmatprep.subr.mxu0 0.0
    %1738 = vmatpush1.msra.mxu0 0.0
    %1739 = vmatprep.subr.mxu0 0.0
    %1740 = vmatpush1.msra.mxu0 0.0
    %1741 = vmatprep.subr.mxu0 0.0
    %1742 = vmatpush1.msra.mxu0 0.0
    %1743 = vmatprep.subr.mxu0 0.0
    %1744 = vmatpush1.msra.mxu0 0.0
    %1745 = vmatprep.subr.mxu0 0.0
    %1746 = vmatpush1.msra.mxu0 0.0
    %1747 = vmatprep.subr.mxu0 0.0
    %1748 = vmatpush1.msra.mxu0 0.0
    %1749 = vmatprep.subr.mxu0 0.0
    %1750 = vmatpush1.msra.mxu0 0.0
    %1751 = vmatprep.subr.mxu0 0.0
    %1752 = vmatpush1.msra.mxu0 0.0
    %1753 = vmatprep.subr.mxu0 0.0
    %1754 = vmatpush1.msra.mxu0 0.0
    %1755 = vmatprep.subr.mxu0 0.0
    %1756 = vmatpush1.msra.mxu0 0.0
    %1757 = vmatprep.subr.mxu0 0.0
    %1758 = vmatpush1.msra.mxu0 0.0
    %1759 = vmatprep.subr.mxu0 0.0
    %1760 = vmatpush1.msra.mxu0 0.0
    %1761 = vmatprep.subr.mxu0 0.0
    %1762 = vmatpush1.msra.mxu0 0.0
    %1763 = vmatprep.subr.mxu0 0.0
    %1764 = vmatpush1.msra.mxu0 0.0
    %1765 = vmatprep.subr.mxu0 0.0
    %1766 = vmatpush1.msra.mxu0 0.0
    %1767 = vmatprep.subr.mxu0 0.0
    %1768 = vmatpush1.msra.mxu0 0.0
    %1769 = vmatprep.subr.mxu0 0.0
    %1770 = vmatpush1.msra.mxu0 0.0
    %1771 = vmatprep.subr.mxu0 0.0
    %1772 = vmatpush1.msra.mxu0 0.0
    %1773 = vmatprep.subr.mxu0 0.0
    %1774 = vmatpush1.msra.mxu0 0.0
    %1775 = vmatprep.subr.mxu0 0.0
    %1776 = vmatpush1.msra.mxu0 0.0
    %1777 = vmatprep.subr.mxu0 0.0
    %1778 = vmatpush1.msra.mxu0 0.0
    %1779 = vmatprep.mubr.f32.mxu0 0.0
    %1780 = vmatmul.mubr.f32.gmra.mrb[0].mxu0 %v1707
    %v1781 = vpop.f32.mrb[0].mxu0
    %v1782 = vadd.f32 %v93, %v1781
    %v1783 = vpop.f32.mrb[0].mxu0
    %1784 = vmatprep.mubr.f32.mxu0 0.0
    %1785 = vmatmul.mubr.f32.gmra.mrb[0].mxu0 %v1710
    %v1786 = vpop.f32.mrb[0].mxu0
    %v1787 = vadd.f32 %v94, %v1786
    %v1788 = vpop.f32.mrb[0].mxu0
    %1789 = vmatprep.mubr.f32.mxu0 0.0
    %1790 = vmatmul.mubr.f32.gmra.mrb[0].mxu0 %v1713
    %v1791 = vpop.f32.mrb[0].mxu0
    %v1792 = vadd.f32 %v95, %v1791
    %v1793 = vpop.f32.mrb[0].mxu0
    %1794 = vdwg.mxu0
    %v1796 = vsel %vm1085, %v1341, 0
    %v1799 = vsel %vm1085, %v1342, 0
    %v1802 = vsel %vm1085, %v1343, 0
    %1804 = vmatprep.subr.mxu0 0.0
    %1805 = vmatpush1.msra.mxu0 %v75
    %1806 = vmatprep.subr.mxu0 0.0
    %1807 = vmatpush1.msra.mxu0 %v76
    %1808 = vmatprep.subr.mxu0 0.0
    %1809 = vmatpush1.msra.mxu0 0.0
    %1810 = vmatprep.subr.mxu0 0.0
    %1811 = vmatpush1.msra.mxu0 0.0
    %1812 = vmatprep.subr.mxu0 0.0
    %1813 = vmatpush1.msra.mxu0 0.0
    %1814 = vmatprep.subr.mxu0 0.0
    %1815 = vmatpush1.msra.mxu0 0.0
    %1816 = vmatprep.subr.mxu0 0.0
    %1817 = vmatpush1.msra.mxu0 0.0
    %1818 = vmatprep.subr.mxu0 0.0
    %1819 = vmatpush1.msra.mxu0 0.0
    %1820 = vmatprep.subr.mxu0 0.0
    %1821 = vmatpush1.msra.mxu0 0.0
    %1822 = vmatprep.subr.mxu0 0.0
    %1823 = vmatpush1.msra.mxu0 0.0
    %1824 = vmatprep.subr.mxu0 0.0
    %1825 = vmatpush1.msra.mxu0 0.0
    %1826 = vmatprep.subr.mxu0 0.0
    %1827 = vmatpush1.msra.mxu0 0.0
    %1828 = vmatprep.subr.mxu0 0.0
    %1829 = vmatpush1.msra.mxu0 0.0
    %1830 = vmatprep.subr.mxu0 0.0
    %1831 = vmatpush1.msra.mxu0 0.0
    %1832 = vmatprep.subr.mxu0 0.0
    %1833 = vmatpush1.msra.mxu0 0.0
    %1834 = vmatprep.subr.mxu0 0.0
    %1835 = vmatpush1.msra.mxu0 0.0
    %1836 = vmatprep.subr.mxu0 0.0
    %1837 = vmatpush1.msra.mxu0 0.0
    %1838 = vmatprep.subr.mxu0 0.0
    %1839 = vmatpush1.msra.mxu0 0.0
    %1840 = vmatprep.subr.mxu0 0.0
    %1841 = vmatpush1.msra.mxu0 0.0
    %1842 = vmatprep.subr.mxu0 0.0
    %1843 = vmatpush1.msra.mxu0 0.0
    %1844 = vmatprep.subr.mxu0 0.0
    %1845 = vmatpush1.msra.mxu0 0.0
    %1846 = vmatprep.subr.mxu0 0.0
    %1847 = vmatpush1.msra.mxu0 0.0
    %1848 = vmatprep.subr.mxu0 0.0
    %1849 = vmatpush1.msra.mxu0 0.0
    %1850 = vmatprep.subr.mxu0 0.0
    %1851 = vmatpush1.msra.mxu0 0.0
    %1852 = vmatprep.subr.mxu0 0.0
    %1853 = vmatpush1.msra.mxu0 0.0
    %1854 = vmatprep.subr.mxu0 0.0
    %1855 = vmatpush1.msra.mxu0 0.0
    %1856 = vmatprep.subr.mxu0 0.0
    %1857 = vmatpush1.msra.mxu0 0.0
    %1858 = vmatprep.subr.mxu0 0.0
    %1859 = vmatpush1.msra.mxu0 0.0
    %1860 = vmatprep.subr.mxu0 0.0
    %1861 = vmatpush1.msra.mxu0 0.0
    %1862 = vmatprep.subr.mxu0 0.0
    %1863 = vmatpush1.msra.mxu0 0.0
    %1864 = vmatprep.subr.mxu0 0.0
    %1865 = vmatpush1.msra.mxu0 0.0
    %1866 = vmatprep.subr.mxu0 0.0
    %1867 = vmatpush1.msra.mxu0 0.0
    %1868 = vmatprep.mubr.f32.mxu0 0.0
    %1869 = vmatmul.mubr.f32.gmra.mrb[0].mxu0 %v1796
    %v1870 = vpop.f32.mrb[0].mxu0
    %v1871 = vadd.f32 %v96, %v1870
    %v1872 = vpop.f32.mrb[0].mxu0
    %1873 = vmatprep.mubr.f32.mxu0 0.0
    %1874 = vmatmul.mubr.f32.gmra.mrb[0].mxu0 %v1799
    %v1875 = vpop.f32.mrb[0].mxu0
    %v1876 = vadd.f32 %v97, %v1875
    %v1877 = vpop.f32.mrb[0].mxu0
    %1878 = vmatprep.mubr.f32.mxu0 0.0
    %1879 = vmatmul.mubr.f32.gmra.mrb[0].mxu0 %v1802
    %v1880 = vpop.f32.mrb[0].mxu0
    %v1881 = vadd.f32 %v98, %v1880
    %v1882 = vpop.f32.mrb[0].mxu0
    %1883 = vdwg.mxu0
    %v1885 = vsel %vm1085, %v1344, 0
    %v1888 = vsel %vm1085, %v1345, 0
    %v1891 = vsel %vm1085, %v1346, 0
    %1893 = vmatprep.subr.mxu0 0.0
    %1894 = vmatpush1.msra.mxu0 %v77
    %1895 = vmatprep.subr.mxu0 0.0
    %1896 = vmatpush1.msra.mxu0 %v78
    %1897 = vmatprep.subr.mxu0 0.0
    %1898 = vmatpush1.msra.mxu0 0.0
    %1899 = vmatprep.subr.mxu0 0.0
    %1900 = vmatpush1.msra.mxu0 0.0
    %1901 = vmatprep.subr.mxu0 0.0
    %1902 = vmatpush1.msra.mxu0 0.0
    %1903 = vmatprep.subr.mxu0 0.0
    %1904 = vmatpush1.msra.mxu0 0.0
    %1905 = vmatprep.subr.mxu0 0.0
    %1906 = vmatpush1.msra.mxu0 0.0
    %1907 = vmatprep.subr.mxu0 0.0
    %1908 = vmatpush1.msra.mxu0 0.0
    %1909 = vmatprep.subr.mxu0 0.0
    %1910 = vmatpush1.msra.mxu0 0.0
    %1911 = vmatprep.subr.mxu0 0.0
    %1912 = vmatpush1.msra.mxu0 0.0
    %1913 = vmatprep.subr.mxu0 0.0
    %1914 = vmatpush1.msra.mxu0 0.0
    %1915 = vmatprep.subr.mxu0 0.0
    %1916 = vmatpush1.msra.mxu0 0.0
    %1917 = vmatprep.subr.mxu0 0.0
    %1918 = vmatpush1.msra.mxu0 0.0
    %1919 = vmatprep.subr.mxu0 0.0
    %1920 = vmatpush1.msra.mxu0 0.0
    %1921 = vmatprep.subr.mxu0 0.0
    %1922 = vmatpush1.msra.mxu0 0.0
    %1923 = vmatprep.subr.mxu0 0.0
    %1924 = vmatpush1.msra.mxu0 0.0
    %1925 = vmatprep.subr.mxu0 0.0
    %1926 = vmatpush1.msra.mxu0 0.0
    %1927 = vmatprep.subr.mxu0 0.0
    %1928 = vmatpush1.msra.mxu0 0.0
    %1929 = vmatprep.subr.mxu0 0.0
    %1930 = vmatpush1.msra.mxu0 0.0
    %1931 = vmatprep.subr.mxu0 0.0
    %1932 = vmatpush1.msra.mxu0 0.0
    %1933 = vmatprep.subr.mxu0 0.0
    %1934 = vmatpush1.msra.mxu0 0.0
    %1935 = vmatprep.subr.mxu0 0.0
    %1936 = vmatpush1.msra.mxu0 0.0
    %1937 = vmatprep.subr.mxu0 0.0
    %1938 = vmatpush1.msra.mxu0 0.0
    %1939 = vmatprep.subr.mxu0 0.0
    %1940 = vmatpush1.msra.mxu0 0.0
    %1941 = vmatprep.subr.mxu0 0.0
    %1942 = vmatpush1.msra.mxu0 0.0
    %1943 = vmatprep.subr.mxu0 0.0
    %1944 = vmatpush1.msra.mxu0 0.0
    %1945 = vmatprep.subr.mxu0 0.0
    %1946 = vmatpush1.msra.mxu0 0.0
    %1947 = vmatprep.subr.mxu0 0.0
    %1948 = vmatpush1.msra.mxu0 0.0
    %1949 = vmatprep.subr.mxu0 0.0
    %1950 = vmatpush1.msra.mxu0 0.0
    %1951 = vmatprep.subr.mxu0 0.0
    %1952 = vmatpush1.msra.mxu0 0.0
    %1953 = vmatprep.subr.mxu0 0.0
    %1954 = vmatpush1.msra.mxu0 0.0
    %1955 = vmatprep.subr.mxu0 0.0
    %1956 = vmatpush1.msra.mxu0 0.0
    %1957 = vmatprep.mubr.f32.mxu0 0.0
    %1958 = vmatmul.mubr.f32.gmra.mrb[0].mxu0 %v1885
    %v1959 = vpop.f32.mrb[0].mxu0
    %v1960 = vadd.f32 %v99, %v1959
    %v1961 = vpop.f32.mrb[0].mxu0
    %1962 = vmatprep.mubr.f32.mxu0 0.0
    %1963 = vmatmul.mubr.f32.gmra.mrb[0].mxu0 %v1888
    %v1964 = vpop.f32.mrb[0].mxu0
    %v1965 = vadd.f32 %v100, %v1964
    %v1966 = vpop.f32.mrb[0].mxu0
    %1967 = vmatprep.mubr.f32.mxu0 0.0
    %1968 = vmatmul.mubr.f32.gmra.mrb[0].mxu0 %v1891
    %v1969 = vpop.f32.mrb[0].mxu0
    %v1970 = vadd.f32 %v101, %v1969
    %v1971 = vpop.f32.mrb[0].mxu0
    %1972 = vdwg.mxu0
    %v1974 = vsel %vm1085, %v1347, 0
    %v1977 = vsel %vm1085, %v1348, 0
    %v1980 = vsel %vm1085, %v1349, 0
    %1982 = vmatprep.subr.mxu0 0.0
    %1983 = vmatpush1.msra.mxu0 %v79
    %1984 = vmatprep.subr.mxu0 0.0
    %1985 = vmatpush1.msra.mxu0 %v80
    %1986 = vmatprep.subr.mxu0 0.0
    %1987 = vmatpush1.msra.mxu0 0.0
    %1988 = vmatprep.subr.mxu0 0.0
    %1989 = vmatpush1.msra.mxu0 0.0
    %1990 = vmatprep.subr.mxu0 0.0
    %1991 = vmatpush1.msra.mxu0 0.0
    %1992 = vmatprep.subr.mxu0 0.0
    %1993 = vmatpush1.msra.mxu0 0.0
    %1994 = vmatprep.subr.mxu0 0.0
    %1995 = vmatpush1.msra.mxu0 0.0
    %1996 = vmatprep.subr.mxu0 0.0
    %1997 = vmatpush1.msra.mxu0 0.0
    %1998 = vmatprep.subr.mxu0 0.0
    %1999 = vmatpush1.msra.mxu0 0.0
    %2000 = vmatprep.subr.mxu0 0.0
    %2001 = vmatpush1.msra.mxu0 0.0
    %2002 = vmatprep.subr.mxu0 0.0
    %2003 = vmatpush1.msra.mxu0 0.0
    %2004 = vmatprep.subr.mxu0 0.0
    %2005 = vmatpush1.msra.mxu0 0.0
    %2006 = vmatprep.subr.mxu0 0.0
    %2007 = vmatpush1.msra.mxu0 0.0
    %2008 = vmatprep.subr.mxu0 0.0
    %2009 = vmatpush1.msra.mxu0 0.0
    %2010 = vmatprep.subr.mxu0 0.0
    %2011 = vmatpush1.msra.mxu0 0.0
    %2012 = vmatprep.subr.mxu0 0.0
    %2013 = vmatpush1.msra.mxu0 0.0
    %2014 = vmatprep.subr.mxu0 0.0
    %2015 = vmatpush1.msra.mxu0 0.0
    %2016 = vmatprep.subr.mxu0 0.0
    %2017 = vmatpush1.msra.mxu0 0.0
    %2018 = vmatprep.subr.mxu0 0.0
    %2019 = vmatpush1.msra.mxu0 0.0
    %2020 = vmatprep.subr.mxu0 0.0
    %2021 = vmatpush1.msra.mxu0 0.0
    %2022 = vmatprep.subr.mxu0 0.0
    %2023 = vmatpush1.msra.mxu0 0.0
    %2024 = vmatprep.subr.mxu0 0.0
    %2025 = vmatpush1.msra.mxu0 0.0
    %2026 = vmatprep.subr.mxu0 0.0
    %2027 = vmatpush1.msra.mxu0 0.0
    %2028 = vmatprep.subr.mxu0 0.0
    %2029 = vmatpush1.msra.mxu0 0.0
    %2030 = vmatprep.subr.mxu0 0.0
    %2031 = vmatpush1.msra.mxu0 0.0
    %2032 = vmatprep.subr.mxu0 0.0
    %2033 = vmatpush1.msra.mxu0 0.0
    %2034 = vmatprep.subr.mxu0 0.0
    %2035 = vmatpush1.msra.mxu0 0.0
    %2036 = vmatprep.subr.mxu0 0.0
    %2037 = vmatpush1.msra.mxu0 0.0
    %2038 = vmatprep.subr.mxu0 0.0
    %2039 = vmatpush1.msra.mxu0 0.0
    %2040 = vmatprep.subr.mxu0 0.0
    %2041 = vmatpush1.msra.mxu0 0.0
    %2042 = vmatprep.subr.mxu0 0.0
    %2043 = vmatpush1.msra.mxu0 0.0
    %2044 = vmatprep.subr.mxu0 0.0
    %2045 = vmatpush1.msra.mxu0 0.0
    %2046 = vmatprep.mubr.f32.mxu0 0.0
    %2047 = vmatmul.mubr.f32.gmra.mrb[0].mxu0 %v1974
    %v2048 = vpop.f32.mrb[0].mxu0
    %v2049 = vadd.f32 %v102, %v2048
    %v2050 = vpop.f32.mrb[0].mxu0
    %2051 = vmatprep.mubr.f32.mxu0 0.0
    %2052 = vmatmul.mubr.f32.gmra.mrb[0].mxu0 %v1977
    %v2053 = vpop.f32.mrb[0].mxu0
    %v2054 = vadd.f32 %v103, %v2053
    %v2055 = vpop.f32.mrb[0].mxu0
    %2056 = vmatprep.mubr.f32.mxu0 0.0
    %2057 = vmatmul.mubr.f32.gmra.mrb[0].mxu0 %v1980
    %v2058 = vpop.f32.mrb[0].mxu0
    %v2059 = vadd.f32 %v104, %v2058
    %v2060 = vpop.f32.mrb[0].mxu0
    %2061 = vdwg.mxu0
    %v2062 = vlaneseq
    %v2063 = vshrl.u32 %v2062, 7
    %v2064 = vadd.s32 %v2063, 8
    %v2065 = vadd.s32 %v2063, 16
    %v2066 = vld [vmem:[%s5] sm:$0xff]
    %v2067 = vcombine.high %v2066, %v2066
    %v2069 = vunpack.c.l.s4 1966171168
    %v2070 = vunpack.c.0.s8 %v2069
    %v2071 = vlaneseq
    %v2072 = vshrl.u32 %v2071, 7
    %v2073 = vsub.s32 %v2070, %v2072
    %v2074 = vrot.slane %v2066, %v2073
    %v2076 = vunpack.c.l.s4 1966171168
    %v2077 = vunpack.c.0.s8 %v2076
    %v2078 = vlaneseq
    %v2079 = vshrl.u32 %v2078, 7
    %v2080 = vsub.s32 %v2077, %v2079
    %v2081 = vrot.slane %v2067, %v2080
    %v2082 = vcombine.high %v2074, %v2074
    %v2083 = vcombine.high %v2081, %v2081
    %v2085 = vunpack.c.l.s4 1966171168
    %v2086 = vunpack.c.0.s8 %v2085
    %v2087 = vlaneseq
    %v2088 = vshrl.u32 %v2087, 7
    %v2089 = vsub.s32 %v2086, %v2088
    %v2090 = vrot.slane %v2074, %v2089
    %v2092 = vunpack.c.l.s4 1966171168
    %v2093 = vunpack.c.0.s8 %v2092
    %v2094 = vlaneseq
    %v2095 = vshrl.u32 %v2094, 7
    %v2096 = vsub.s32 %v2093, %v2095
    %v2097 = vrot.slane %v2081, %v2096
    %v2099 = vunpack.c.l.s4 1966171168
    %v2100 = vunpack.c.0.s8 %v2099
    %v2101 = vlaneseq
    %v2102 = vshrl.u32 %v2101, 7
    %v2103 = vsub.s32 %v2100, %v2102
    %v2104 = vrot.slane %v2082, %v2103
    %v2106 = vunpack.c.l.s4 1966171168
    %v2107 = vunpack.c.0.s8 %v2106
    %v2108 = vlaneseq
    %v2109 = vshrl.u32 %v2108, 7
    %v2110 = vsub.s32 %v2107, %v2109
    %v2111 = vrot.slane %v2083, %v2110
    %v2112 = vcombine.high %v2090, %v2090
    %v2113 = vcombine.high %v2097, %v2097
    %v2114 = vcombine.high %v2104, %v2104
    %v2115 = vcombine.high %v2111, %v2111
    %v2116 = vlaneseq
    %v2117 = vshrl.u32 %v2116, 7
    %v2118 = vsub.s32 0, %v2117
    %v2119 = vrot.slane %v2090, %v2118
    %v2120 = vlaneseq
    %v2121 = vshrl.u32 %v2120, 7
    %v2122 = vsub.s32 0, %v2121
    %v2123 = vrot.slane %v2104, %v2122
    %v2124 = vlaneseq
    %v2125 = vshrl.u32 %v2124, 7
    %v2126 = vsub.s32 0, %v2125
    %v2127 = vrot.slane %v2112, %v2126
    %v2128 = vlaneseq
    %v2129 = vshrl.u32 %v2128, 7
    %v2130 = vsub.s32 0, %v2129
    %v2131 = vrot.slane %v2114, %v2130
    %v2132 = vlaneseq
    %v2133 = vshrl.u32 %v2132, 7
    %v2134 = vsub.s32 0, %v2133
    %v2135 = vrot.slane %v2097, %v2134
    %v2136 = vlaneseq
    %v2137 = vshrl.u32 %v2136, 7
    %v2138 = vsub.s32 0, %v2137
    %v2139 = vrot.slane %v2111, %v2138
    %v2140 = vlaneseq
    %v2141 = vshrl.u32 %v2140, 7
    %v2142 = vsub.s32 0, %v2141
    %v2143 = vrot.slane %v2113, %v2142
    %v2144 = vlaneseq
    %v2145 = vshrl.u32 %v2144, 7
    %v2146 = vsub.s32 0, %v2145
    %v2147 = vrot.slane %v2115, %v2146
    %vm2148 = vcmp.lt.s32.totalorder %v2063, %v2119
    %vm2149 = vcmp.lt.s32.totalorder %v2064, %v2119
    %vm2150 = vcmp.lt.s32.totalorder %v2065, %v2119
    %vm2151 = vcmp.lt.s32.totalorder %v2063, %v2123
    %vm2152 = vcmp.lt.s32.totalorder %v2064, %v2123
    %vm2153 = vcmp.lt.s32.totalorder %v2065, %v2123
    %vm2154 = vcmp.lt.s32.totalorder %v2063, %v2127
    %vm2155 = vcmp.lt.s32.totalorder %v2064, %v2127
    %vm2156 = vcmp.lt.s32.totalorder %v2065, %v2127
    %vm2157 = vcmp.lt.s32.totalorder %v2063, %v2131
    %vm2158 = vcmp.lt.s32.totalorder %v2064, %v2131
    %vm2159 = vcmp.lt.s32.totalorder %v2065, %v2131
    %vm2160 = vcmp.lt.s32.totalorder %v2063, %v2135
    %vm2161 = vcmp.lt.s32.totalorder %v2064, %v2135
    %vm2162 = vcmp.lt.s32.totalorder %v2065, %v2135
    %vm2163 = vcmp.lt.s32.totalorder %v2063, %v2139
    %vm2164 = vcmp.lt.s32.totalorder %v2064, %v2139
    %vm2165 = vcmp.lt.s32.totalorder %v2065, %v2139
    %vm2166 = vcmp.lt.s32.totalorder %v2063, %v2143
    %vm2167 = vcmp.lt.s32.totalorder %v2064, %v2143
    %vm2168 = vcmp.lt.s32.totalorder %v2065, %v2143
    %vm2169 = vcmp.lt.s32.totalorder %v2063, %v2147
    %vm2170 = vcmp.lt.s32.totalorder %v2064, %v2147
    %vm2171 = vcmp.lt.s32.totalorder %v2065, %v2147
    %v2172 = vsel %vm2148, 1, 0
    %v2173 = vsel %vm2149, 1, 0
    %v2174 = vsel %vm2150, 1, 0
    %v2175 = vsel %vm2151, 1, 0
    %v2176 = vsel %vm2152, 1, 0
    %v2177 = vsel %vm2153, 1, 0
    %v2178 = vsel %vm2154, 1, 0
    %v2179 = vsel %vm2155, 1, 0
    %v2180 = vsel %vm2156, 1, 0
    %v2181 = vsel %vm2157, 1, 0
    %v2182 = vsel %vm2158, 1, 0
    %v2183 = vsel %vm2159, 1, 0
    %v2184 = vsel %vm2160, 1, 0
    %v2185 = vsel %vm2161, 1, 0
    %v2186 = vsel %vm2162, 1, 0
    %v2187 = vsel %vm2163, 1, 0
    %v2188 = vsel %vm2164, 1, 0
    %v2189 = vsel %vm2165, 1, 0
    %v2190 = vsel %vm2166, 1, 0
    %v2191 = vsel %vm2167, 1, 0
    %v2192 = vsel %vm2168, 1, 0
    %v2193 = vsel %vm2169, 1, 0
    %v2194 = vsel %vm2170, 1, 0
    %v2195 = vsel %vm2171, 1, 0
    %2196 = vset.pattern.permute.xlu0 0
    %2197 = vperm.xlu0 %2196, %v2172
    %v2198 = vpop.permute.xlu0 %2197
    %2199 = vset.pattern.permute.xlu0 0
    %2200 = vperm.xlu0 %2199, %v2173
    %v2201 = vpop.permute.xlu0 %2200
    %2202 = vset.pattern.permute.xlu0 0
    %2203 = vperm.xlu0 %2202, %v2174
    %v2204 = vpop.permute.xlu0 %2203
    %2205 = vset.pattern.permute.xlu0 0
    %2206 = vperm.xlu0 %2205, %v2175
    %v2207 = vpop.permute.xlu0 %2206
    %2208 = vset.pattern.permute.xlu0 0
    %2209 = vperm.xlu0 %2208, %v2176
    %v2210 = vpop.permute.xlu0 %2209
    %2211 = vset.pattern.permute.xlu0 0
    %2212 = vperm.xlu0 %2211, %v2177
    %v2213 = vpop.permute.xlu0 %2212
    %2214 = vset.pattern.permute.xlu0 0
    %2215 = vperm.xlu0 %2214, %v2178
    %v2216 = vpop.permute.xlu0 %2215
    %2217 = vset.pattern.permute.xlu0 0
    %2218 = vperm.xlu0 %2217, %v2179
    %v2219 = vpop.permute.xlu0 %2218
    %2220 = vset.pattern.permute.xlu0 0
    %2221 = vperm.xlu0 %2220, %v2180
    %v2222 = vpop.permute.xlu0 %2221
    %2223 = vset.pattern.permute.xlu0 0
    %2224 = vperm.xlu0 %2223, %v2181
    %v2225 = vpop.permute.xlu0 %2224
    %2226 = vset.pattern.permute.xlu0 0
    %2227 = vperm.xlu0 %2226, %v2182
    %v2228 = vpop.permute.xlu0 %2227
    %2229 = vset.pattern.permute.xlu0 0
    %2230 = vperm.xlu0 %2229, %v2183
    %v2231 = vpop.permute.xlu0 %2230
    %2232 = vset.pattern.permute.xlu0 0
    %2233 = vperm.xlu0 %2232, %v2184
    %v2234 = vpop.permute.xlu0 %2233
    %2235 = vset.pattern.permute.xlu0 0
    %2236 = vperm.xlu0 %2235, %v2185
    %v2237 = vpop.permute.xlu0 %2236
    %2238 = vset.pattern.permute.xlu0 0
    %2239 = vperm.xlu0 %2238, %v2186
    %v2240 = vpop.permute.xlu0 %2239
    %2241 = vset.pattern.permute.xlu0 0
    %2242 = vperm.xlu0 %2241, %v2187
    %v2243 = vpop.permute.xlu0 %2242
    %2244 = vset.pattern.permute.xlu0 0
    %2245 = vperm.xlu0 %2244, %v2188
    %v2246 = vpop.permute.xlu0 %2245
    %2247 = vset.pattern.permute.xlu0 0
    %2248 = vperm.xlu0 %2247, %v2189
    %v2249 = vpop.permute.xlu0 %2248
    %2250 = vset.pattern.permute.xlu0 0
    %2251 = vperm.xlu0 %2250, %v2190
    %v2252 = vpop.permute.xlu0 %2251
    %2253 = vset.pattern.permute.xlu0 0
    %2254 = vperm.xlu0 %2253, %v2191
    %v2255 = vpop.permute.xlu0 %2254
    %2256 = vset.pattern.permute.xlu0 0
    %2257 = vperm.xlu0 %2256, %v2192
    %v2258 = vpop.permute.xlu0 %2257
    %2259 = vset.pattern.permute.xlu0 0
    %2260 = vperm.xlu0 %2259, %v2193
    %v2261 = vpop.permute.xlu0 %2260
    %2262 = vset.pattern.permute.xlu0 0
    %2263 = vperm.xlu0 %2262, %v2194
    %v2264 = vpop.permute.xlu0 %2263
    %2265 = vset.pattern.permute.xlu0 0
    %2266 = vperm.xlu0 %2265, %v2195
    %v2267 = vpop.permute.xlu0 %2266
    %vm2268 = vcmp.eq.s32.totalorder %v2198, 1
    %vm2269 = vcmp.eq.s32.totalorder %v2201, 1
    %vm2270 = vcmp.eq.s32.totalorder %v2204, 1
    %vm2271 = vcmp.eq.s32.totalorder %v2207, 1
    %vm2272 = vcmp.eq.s32.totalorder %v2210, 1
    %vm2273 = vcmp.eq.s32.totalorder %v2213, 1
    %vm2274 = vcmp.eq.s32.totalorder %v2216, 1
    %vm2275 = vcmp.eq.s32.totalorder %v2219, 1
    %vm2276 = vcmp.eq.s32.totalorder %v2222, 1
    %vm2277 = vcmp.eq.s32.totalorder %v2225, 1
    %vm2278 = vcmp.eq.s32.totalorder %v2228, 1
    %vm2279 = vcmp.eq.s32.totalorder %v2231, 1
    %vm2280 = vcmp.eq.s32.totalorder %v2234, 1
    %vm2281 = vcmp.eq.s32.totalorder %v2237, 1
    %vm2282 = vcmp.eq.s32.totalorder %v2240, 1
    %vm2283 = vcmp.eq.s32.totalorder %v2243, 1
    %vm2284 = vcmp.eq.s32.totalorder %v2246, 1
    %vm2285 = vcmp.eq.s32.totalorder %v2249, 1
    %vm2286 = vcmp.eq.s32.totalorder %v2252, 1
    %vm2287 = vcmp.eq.s32.totalorder %v2255, 1
    %vm2288 = vcmp.eq.s32.totalorder %v2258, 1
    %vm2289 = vcmp.eq.s32.totalorder %v2261, 1
    %vm2290 = vcmp.eq.s32.totalorder %v2264, 1
    %vm2291 = vcmp.eq.s32.totalorder %v2267, 1
    %v2292 = vsel %vm2268, %v1426, 0.0
    %v2293 = vsel %vm2269, %v1431, 0.0
    %v2294 = vsel %vm2270, %v1436, 0.0
    %v2295 = vsel %vm2271, %v1515, 0.0
    %v2296 = vsel %vm2272, %v1520, 0.0
    %v2297 = vsel %vm2273, %v1525, 0.0
    %v2298 = vsel %vm2274, %v1604, 0.0
    %v2299 = vsel %vm2275, %v1609, 0.0
    %v2300 = vsel %vm2276, %v1614, 0.0
    %v2301 = vsel %vm2277, %v1693, 0.0
    %v2302 = vsel %vm2278, %v1698, 0.0
    %v2303 = vsel %vm2279, %v1703, 0.0
    %v2304 = vsel %vm2280, %v1782, 0.0
    %v2305 = vsel %vm2281, %v1787, 0.0
    %v2306 = vsel %vm2282, %v1792, 0.0
    %v2307 = vsel %vm2283, %v1871, 0.0
    %v2308 = vsel %vm2284, %v1876, 0.0
    %v2309 = vsel %vm2285, %v1881, 0.0
    %v2310 = vsel %vm2286, %v1960, 0.0
    %v2311 = vsel %vm2287, %v1965, 0.0
    %v2312 = vsel %vm2288, %v1970, 0.0
    %v2313 = vsel %vm2289, %v2049, 0.0
    %v2314 = vsel %vm2290, %v2054, 0.0
    %v2315 = vsel %vm2291, %v2059, 0.0
    %2316 = vst [vmem:[#allocation8] sm:$0xff] %v2292
    %2317 = vst [vmem:[#allocation8 + $0x8] sm:$0xff] %v2293
    %2318 = vst [vmem:[#allocation8 + $0x10] sm:$0xff] %v2294
    %2319 = vst [vmem:[#allocation8 + $0x18] sm:$0xff] %v2295
    %2320 = vst [vmem:[#allocation8 + $0x20] sm:$0xff] %v2296
    %2321 = vst [vmem:[#allocation8 + $0x28] sm:$0xff] %v2297
    %2322 = vst [vmem:[#allocation8 + $0x30] sm:$0xff] %v2298
    %2323 = vst [vmem:[#allocation8 + $0x38] sm:$0xff] %v2299
    %2324 = vst [vmem:[#allocation8 + $0x40] sm:$0xff] %v2300
    %2325 = vst [vmem:[#allocation8 + $0x48] sm:$0xff] %v2301
    %2326 = vst [vmem:[#allocation8 + $0x50] sm:$0xff] %v2302
    %2327 = vst [vmem:[#allocation8 + $0x58] sm:$0xff] %v2303
    %2328 = vst [vmem:[#allocation8 + $0x60] sm:$0xff] %v2304
    %2329 = vst [vmem:[#allocation8 + $0x68] sm:$0xff] %v2305
    %2330 = vst [vmem:[#allocation8 + $0x70] sm:$0xff] %v2306
    %2331 = vst [vmem:[#allocation8 + $0x78] sm:$0xff] %v2307
    %2332 = vst [vmem:[#allocation8 + $0x80] sm:$0xff] %v2308
    %2333 = vst [vmem:[#allocation8 + $0x88] sm:$0xff] %v2309
    %2334 = vst [vmem:[#allocation8 + $0x90] sm:$0xff] %v2310
    %2335 = vst [vmem:[#allocation8 + $0x98] sm:$0xff] %v2311
    %2336 = vst [vmem:[#allocation8 + $0xa0] sm:$0xff] %v2312
    %2337 = vst [vmem:[#allocation8 + $0xa8] sm:$0xff] %v2313
    %2338 = vst [vmem:[#allocation8 + $0xb0] sm:$0xff] %v2314
    %2339 = vst [vmem:[#allocation8 + $0xb8] sm:$0xff] %v2315
    // Predicated region
    $region38: #{tpu_custom_call.1} parent=1 // pred_check
      _
    $region39: #{tpu_custom_call.1} parent=1 // pred_check_branch
      %2341 = sbr.rel (0) target = $region41
    $region40: #{tpu_custom_call.1} parent=1 // pred_region
      %s2343 = ssub.s32 3072, 3072
      %2344 = vsyncadd [#allocation4], %s2343
      %s2345 = sshll.u32 [#allocation8], 4
      %s2346 = int_to_ptr.vmem [resolvable:$true] %s2345
      %2351 = dma.vmem_to_hbm [thread:$0]  %s2346, 3072, %s6, [#allocation4], 128, 128, 8
    $region41: #{tpu_custom_call.1} parent=1 // pred_fallthru
      _
    // Predicated region
    $region42: #{tpu_custom_call.1} parent=1 // pred_check
      _
    $region43: #{tpu_custom_call.1} parent=1 // pred_check_branch
      %2353 = sbr.rel (0) target = $region45
    $region44: #{tpu_custom_call.1} parent=1 // pred_region
      %2354 = dma.done [#allocation4], 3072
    $region45: #{tpu_custom_call.1} parent=1 // pred_fallthru
      _
    %2355 = vsyncpa [#allocation3], 1
    %2356 = vsyncpa [#allocation6], 1
    %2357 = vsyncpa [#allocation4], 1

</llo_original>
